<compile_context>
chip_gen: v6e
topology: v6e:2x2x1
jax: 0.10.0
libtpu: 0.0.40
codegen_flags: <defaults>
</compile_context>

<pallas_src>
import jax
import jax.numpy as jnp
from jax.experimental import pallas as pl
from jax.experimental.pallas import tpu as pltpu


NUM_MM = 12              # assumed len(Multimodal_features)
BACKBONE_OUT = 1000      # resnet50 classifier out_features
FC1_OUT = 512 - NUM_MM   # 500
HIDDEN = 512
NUM_CLASS = 10
BN_EPS = 1e-5

FEAT_PAD = 1024          # lane-aligned contraction dim for the fused fc1
OUT_PAD = 128            # lane-dense output slab width


def _emoji_head_kernel(feat_ref, mmf_ref,
                       w1q_ref, s1_ref, b1_ref,
                       w23_ref, b23_ref,
                       w45_ref, b45_ref,
                       out_ref,
                       xpad_ref):
    B = feat_ref.shape[0]

    # Build the fused [backbone | multimodal | 0] bf16 slab. Only the 12-lane
    # zero tail is an extra store — no full-width zero-fill (review item).
    xpad_ref[:, :BACKBONE_OUT] = feat_ref[...].astype(jnp.bfloat16)
    xpad_ref[:, BACKBONE_OUT:BACKBONE_OUT + NUM_MM] = (
        mmf_ref[...].astype(jnp.bfloat16))
    xpad_ref[:, BACKBONE_OUT + NUM_MM:] = jnp.zeros(
        (B, FEAT_PAD - BACKBONE_OUT - NUM_MM), jnp.bfloat16)
    x = xpad_ref[...]

    # fc1 + concat folded into one matmul: int8 weights dequantized to bf16,
    # per-output-column scale applied in the f32 epilogue (exact for the
    # identity block that carries the multimodal features).
    w1 = w1q_ref[...].astype(jnp.bfloat16)
    h = jnp.dot(x, w1, preferred_element_type=jnp.float32)
    h = h * s1_ref[...] + b1_ref[...]

    # BatchNorm1d, training-mode batch statistics (biased variance).
    mean = jnp.mean(h, axis=0, keepdims=True)
    var = jnp.mean((h - mean) ** 2, axis=0, keepdims=True)
    h = (h - mean) * jax.lax.rsqrt(var + BN_EPS)

    # (BN affine + fc2 + fc3) folded into one matmul, then ReLU.
    h = jnp.dot(h.astype(jnp.bfloat16), w23_ref[...],
                preferred_element_type=jnp.float32) + b23_ref[...]
    h = jnp.maximum(h, 0.0)

    # (fc4 + fc5) folded into one matmul; classes padded lane-dense to 128.
    logits = jnp.dot(h.astype(jnp.bfloat16), w45_ref[...],
                     preferred_element_type=jnp.float32) + b45_ref[...]

    # Softmax over the NUM_CLASS real classes. Padded lanes masked with -1e30;
    # this path must stay f32 (the mask would overflow in bf16).
    col = jax.lax.broadcasted_iota(jnp.int32, logits.shape, 1)
    logits = jnp.where(col < NUM_CLASS, logits, -1e30)
    logits = logits - jnp.max(logits, axis=1, keepdims=True)
    e = jnp.exp(logits)
    denom = jnp.sum(e, axis=1, keepdims=True)
    # Divide on the (otherwise idle) EUP slot.
    out_ref[...] = e * pl.reciprocal(denom, approx=True)


@jax.jit
def emoji_net_forward(backbone_feat, multimodal_feature, folded_params):
    """backbone_feat: (B, 1000) f32 ; multimodal_feature: (B, NUM_MM) f32."""
    B = backbone_feat.shape[0]
    out = pl.pallas_call(
        _emoji_head_kernel,
        out_shape=jax.ShapeDtypeStruct((B, OUT_PAD), jnp.float32),
        # Gridless: whole arrays as single VMEM blocks (no double-buffering).
        scratch_shapes=[pltpu.VMEM((B, FEAT_PAD), jnp.bfloat16)],
        compiler_params=pltpu.CompilerParams(
            vmem_limit_bytes=32 * 1024 * 1024),
    )(backbone_feat, multimodal_feature, *folded_params)
    return out[:, :NUM_CLASS]


def init_params(key):
    """PyTorch-style init. Weights stored as (in, out); biases as (1, out)."""
    ks = jax.random.split(key, 5)

    def lin(k, fan_in, fan_out):
        kw, kb = jax.random.split(k)
        scale = 1.0 / jnp.sqrt(fan_in)
        w = jax.random.uniform(kw, (fan_in, fan_out), jnp.float32, -scale, scale)
        b = jax.random.uniform(kb, (1, fan_out), jnp.float32, -scale, scale)
        return w, b

    w1, b1 = lin(ks[0], BACKBONE_OUT, FC1_OUT)   # 1000 -> 500
    gamma = jnp.ones((1, HIDDEN), jnp.float32)   # BatchNorm1d affine init
    beta = jnp.zeros((1, HIDDEN), jnp.float32)
    w2, b2 = lin(ks[1], HIDDEN, HIDDEN)          # 512 -> 512
    w3, b3 = lin(ks[2], HIDDEN, 256)             # 512 -> 256
    w4, b4 = lin(ks[3], 256, 128)                # 256 -> 128
    w5, b5 = lin(ks[4], 128, NUM_CLASS)          # 128 -> num_class
    return (w1, b1, gamma, beta, w2, b2, w3, b3, w4, b4, w5, b5)


def fold_params(params):
    """Fold fc1+concat into one int8 matmul, (BN affine + fc2 + fc3) and
    (fc4 + fc5) into bf16 matmuls; pad the output lane-dense."""
    (w1, b1, gamma, beta, w2, b2, w3, b3, w4, b4, w5, b5) = params

    # fc1 + concat as a single (1024 x 512) matmul:
    #   rows    0..999  : fc1 weights
    #   rows 1000..1011 : identity block -> multimodal features pass through
    #                     (exactly) to output columns 500..511
    #   rows 1012..1023 : zero lane padding
    w1f = jnp.zeros((FEAT_PAD, HIDDEN), jnp.float32)
    w1f = w1f.at[:BACKBONE_OUT, :FC1_OUT].set(w1)
    w1f = w1f.at[BACKBONE_OUT:BACKBONE_OUT + NUM_MM, FC1_OUT:].set(
        jnp.eye(NUM_MM, dtype=jnp.float32))
    b1f = jnp.zeros((1, HIDDEN), jnp.float32).at[:, :FC1_OUT].set(b1)

    # Symmetric per-output-column int8 quantization of the fused fc1 weight.
    absmax = jnp.max(jnp.abs(w1f), axis=0, keepdims=True)           # (1, 512)
    s1 = jnp.where(absmax > 0, absmax, 1.0) / 127.0
    w1q = jnp.clip(jnp.round(w1f / s1), -127, 127).astype(jnp.int8)

    # (BN affine) -> fc2 -> fc3:
    #   y = h @ (diag(gamma) W2 W3) + (beta W2 W3 + b2 W3 + b3)
    w23_raw = w2 @ w3
    w23 = gamma.reshape(HIDDEN, 1) * w23_raw
    b23 = beta @ w23_raw + b2 @ w3 + b3

    # fc4 -> fc5, output padded lane-dense to OUT_PAD classes.
    w45_raw = w4 @ w5
    b45_raw = b4 @ w5 + b5
    w45 = jnp.zeros((256, OUT_PAD), jnp.float32).at[:, :NUM_CLASS].set(w45_raw)
    b45 = jnp.zeros((1, OUT_PAD), jnp.float32).at[:, :NUM_CLASS].set(b45_raw)

    # Invariants the concat-as-matmul trick relies on (perf-review concern):
    deq = w1q.astype(jnp.float32) * s1
    assert bool(jnp.all(jnp.abs(
        deq[BACKBONE_OUT:BACKBONE_OUT + NUM_MM, FC1_OUT:] - jnp.eye(NUM_MM)) < 1e-6))
    assert bool(jnp.all(deq[:BACKBONE_OUT, FC1_OUT:] == 0.0))
    assert bool(jnp.all(deq[BACKBONE_OUT + NUM_MM:, :] == 0.0))
    assert bool(jnp.all(b1f[:, FC1_OUT:] == 0.0))

    return (w1q, s1, b1f,
            w23.astype(jnp.bfloat16), b23,
            w45.astype(jnp.bfloat16), b45)


def _reference_f32(backbone_feat, multimodal_feature, params):
    """Pure-JAX f32 reference of the original (unfolded) module semantics."""
    (w1, b1, gamma, beta, w2, b2, w3, b3, w4, b4, w5, b5) = params
    x = backbone_feat @ w1 + b1
    h = jnp.concatenate([x, multimodal_feature], axis=1)
    mean = jnp.mean(h, axis=0, keepdims=True)
    var = jnp.mean((h - mean) ** 2, axis=0, keepdims=True)
    h = (h - mean) / jnp.sqrt(var + BN_EPS) * gamma + beta
    h = h @ w2 + b2
    h = jnp.maximum(h @ w3 + b3, 0.0)
    h = h @ w4 + b4
    logits = h @ w5 + b5
    return jax.nn.softmax(logits, axis=1)


def _reference_folded(backbone_feat, multimodal_feature, fparams):
    """Pure-JAX mirror of the kernel's folded / quantized numerics."""
    (w1q, s1, b1, w23, b23, w45, b45) = fparams
    B = backbone_feat.shape[0]
    xpad = jnp.zeros((B, FEAT_PAD), jnp.bfloat16)
    xpad = xpad.at[:, :BACKBONE_OUT].set(backbone_feat.astype(jnp.bfloat16))
    xpad = xpad.at[:, BACKBONE_OUT:BACKBONE_OUT + NUM_MM].set(
        multimodal_feature.astype(jnp.bfloat16))
    h = jnp.dot(xpad, w1q.astype(jnp.bfloat16),
                preferred_element_type=jnp.float32) * s1 + b1
    mean = jnp.mean(h, axis=0, keepdims=True)
    var = jnp.mean((h - mean) ** 2, axis=0, keepdims=True)
    h = (h - mean) * jax.lax.rsqrt(var + BN_EPS)
    h = jnp.dot(h.astype(jnp.bfloat16), w23, preferred_element_type=jnp.float32) + b23
    h = jnp.maximum(h, 0.0)
    logits = jnp.dot(h.astype(jnp.bfloat16), w45, preferred_element_type=jnp.float32) + b45
    logits = logits[:, :NUM_CLASS]
    logits = logits - jnp.max(logits, axis=1, keepdims=True)
    e = jnp.exp(logits)
    return e / jnp.sum(e, axis=1, keepdims=True)


if __name__ == "__main__":
    key = jax.random.PRNGKey(0)
    k_feat, k_mm, k_param = jax.random.split(key, 3)

    B = 2
    backbone_feat = jax.random.normal(k_feat, (B, BACKBONE_OUT), jnp.float32)
    multimodal_feature = jax.random.normal(k_mm, (B, NUM_MM), jnp.float32)

    params = init_params(k_param)
    fparams = fold_params(params)

    out = emoji_net_forward(backbone_feat, multimodal_feature, fparams)
    out = jax.block_until_ready(out)

    assert out.shape == (B, NUM_CLASS)
    assert bool(jnp.all(jnp.isfinite(out)))
    # approx (EUP) reciprocal in the softmax epilogue -> row sums are 1 only
    # to the approximation's relative error; allow slack.
    assert bool(jnp.allclose(jnp.sum(out, axis=1), 1.0, atol=1e-2))

    # Check vs. a pure-JAX mirror of the kernel's folded/int8/bf16 numerics
    # (slack only for the approx-reciprocal epilogue).
    ref_folded = _reference_folded(backbone_feat, multimodal_feature, fparams)
    assert bool(jnp.allclose(out, ref_folded, atol=1e-2, rtol=1e-2))

    # Loose check vs. the original unfolded f32 module semantics (bf16 inputs,
    # int8 fc1 weights and folded-composite bf16 weights introduce ~1e-3..1e-2
    # level deviations in the softmax output).
    ref_f32 = _reference_f32(backbone_feat, multimodal_feature, params)
    assert bool(jnp.allclose(out, ref_f32, atol=3e-2))

    print("KERNEL_OK")
</pallas_src>

<mosaic_0001>
module attributes {stable_mosaic.version = 11 : i64} {
  func.func @_emoji_head_kernel(%arg0: memref<2x1000xf32, #tpu.memory_space<vmem>>, %arg1: memref<2x12xf32, #tpu.memory_space<vmem>>, %arg2: memref<1024x512xi8, #tpu.memory_space<vmem>>, %arg3: memref<1x512xf32, #tpu.memory_space<vmem>>, %arg4: memref<1x512xf32, #tpu.memory_space<vmem>>, %arg5: memref<512x256xbf16, #tpu.memory_space<vmem>>, %arg6: memref<1x256xf32, #tpu.memory_space<vmem>>, %arg7: memref<256x128xbf16, #tpu.memory_space<vmem>>, %arg8: memref<1x128xf32, #tpu.memory_space<vmem>>, %arg9: memref<2x128xf32, #tpu.memory_space<vmem>>, %arg10: memref<2x1024xbf16, #tpu.memory_space<vmem>>) attributes {dimension_semantics = [], scalar_prefetch = 0 : i64, scratch_operands = 1 : i64, tpu.core_type = #tpu.core_type<tc>} {
    %c0 = arith.constant 0 : index
    %c0_0 = arith.constant 0 : index
    %0 = vector.load %arg0[%c0, %c0_0] : memref<2x1000xf32, #tpu.memory_space<vmem>>, vector<2x1000xf32>
    %1 = arith.truncf %0 : vector<2x1000xf32> to vector<2x1000xbf16>
    %c0_1 = arith.constant 0 : index
    %c0_2 = arith.constant 0 : index
    %2 = vector.load %arg10[%c0_1, %c0_2] : memref<2x1024xbf16, #tpu.memory_space<vmem>>, vector<2x1000xbf16>
    tpu.vector_store %arg10[%c0_1, %c0_2], %1 {strides = array<i32>} : memref<2x1024xbf16, #tpu.memory_space<vmem>>, vector<2x1000xbf16>,
    %c0_3 = arith.constant 0 : index
    %c0_4 = arith.constant 0 : index
    %3 = vector.load %arg1[%c0_3, %c0_4] : memref<2x12xf32, #tpu.memory_space<vmem>>, vector<2x12xf32>
    %4 = arith.truncf %3 : vector<2x12xf32> to vector<2x12xbf16>
    %c0_5 = arith.constant 0 : index
    %c1000 = arith.constant 1000 : index
    %5 = vector.load %arg10[%c0_5, %c1000] : memref<2x1024xbf16, #tpu.memory_space<vmem>>, vector<2x12xbf16>
    tpu.vector_store %arg10[%c0_5, %c1000], %4 {strides = array<i32>} : memref<2x1024xbf16, #tpu.memory_space<vmem>>, vector<2x12xbf16>,
    %cst = arith.constant 0.000000e+00 : bf16
    %6 = vector.broadcast %cst : bf16 to vector<2x12xbf16>
    %c0_6 = arith.constant 0 : index
    %c1012 = arith.constant 1012 : index
    %7 = vector.load %arg10[%c0_6, %c1012] : memref<2x1024xbf16, #tpu.memory_space<vmem>>, vector<2x12xbf16>
    tpu.vector_store %arg10[%c0_6, %c1012], %6 {strides = array<i32>} : memref<2x1024xbf16, #tpu.memory_space<vmem>>, vector<2x12xbf16>,
    %c0_7 = arith.constant 0 : index
    %c0_8 = arith.constant 0 : index
    %8 = vector.load %arg10[%c0_7, %c0_8] : memref<2x1024xbf16, #tpu.memory_space<vmem>>, vector<2x1024xbf16>
    %c0_9 = arith.constant 0 : index
    %c0_10 = arith.constant 0 : index
    %9 = vector.load %arg2[%c0_9, %c0_10] : memref<1024x512xi8, #tpu.memory_space<vmem>>, vector<1024x512xi8>
    %10 = arith.sitofp %9 : vector<1024x512xi8> to vector<1024x512xbf16>
    %cst_11 = arith.constant dense<0.000000e+00> : vector<2x512xf32>
    %11 = tpu.matmul %8, %10, %cst_11 {dimension_numbers = #tpu.dot_dimension_numbers<[1], [0], [0], [1], [0, 0, 1, 1], [], []>} : vector<2x1024xbf16>, vector<1024x512xbf16>, vector<2x512xf32> -> vector<2x512xf32>
    %c0_12 = arith.constant 0 : index
    %c0_13 = arith.constant 0 : index
    %12 = vector.load %arg3[%c0_12, %c0_13] : memref<1x512xf32, #tpu.memory_space<vmem>>, vector<1x512xf32>
    %13 = vector.broadcast %12 : vector<1x512xf32> to vector<2x512xf32>
    %14 = arith.mulf %11, %13 : vector<2x512xf32>
    %c0_14 = arith.constant 0 : index
    %c0_15 = arith.constant 0 : index
    %15 = vector.load %arg4[%c0_14, %c0_15] : memref<1x512xf32, #tpu.memory_space<vmem>>, vector<1x512xf32>
    %16 = vector.broadcast %15 : vector<1x512xf32> to vector<2x512xf32>
    %17 = arith.addf %14, %16 : vector<2x512xf32>
    %cst_16 = arith.constant dense<0.000000e+00> : vector<512xf32>
    %18 = vector.multi_reduction <add>, %17, %cst_16 [0] : vector<2x512xf32> to vector<512xf32>
    %19 = vector.shape_cast %18 : vector<512xf32> to vector<1x512xf32>
    %cst_17 = arith.constant 2.000000e+00 : f32
    %20 = vector.broadcast %cst_17 : f32 to vector<1x512xf32>
    %21 = arith.divf %19, %20 : vector<1x512xf32>
    %22 = vector.broadcast %21 : vector<1x512xf32> to vector<2x512xf32>
    %23 = arith.subf %17, %22 : vector<2x512xf32>
    %24 = arith.mulf %23, %23 : vector<2x512xf32>
    %cst_18 = arith.constant dense<0.000000e+00> : vector<512xf32>
    %25 = vector.multi_reduction <add>, %24, %cst_18 [0] : vector<2x512xf32> to vector<512xf32>
    %26 = vector.shape_cast %25 : vector<512xf32> to vector<1x512xf32>
    %cst_19 = arith.constant 2.000000e+00 : f32
    %27 = vector.broadcast %cst_19 : f32 to vector<1x512xf32>
    %28 = arith.divf %26, %27 : vector<1x512xf32>
    %29 = vector.broadcast %21 : vector<1x512xf32> to vector<2x512xf32>
    %30 = arith.subf %17, %29 : vector<2x512xf32>
    %cst_20 = arith.constant 9.99999974E-6 : f32
    %31 = vector.broadcast %cst_20 : f32 to vector<1x512xf32>
    %32 = arith.addf %28, %31 : vector<1x512xf32>
    %33 = math.rsqrt %32 : vector<1x512xf32>
    %34 = vector.broadcast %33 : vector<1x512xf32> to vector<2x512xf32>
    %35 = arith.mulf %30, %34 : vector<2x512xf32>
    %36 = arith.truncf %35 : vector<2x512xf32> to vector<2x512xbf16>
    %c0_21 = arith.constant 0 : index
    %c0_22 = arith.constant 0 : index
    %37 = vector.load %arg5[%c0_21, %c0_22] : memref<512x256xbf16, #tpu.memory_space<vmem>>, vector<512x256xbf16>
    %cst_23 = arith.constant dense<0.000000e+00> : vector<2x256xf32>
    %38 = tpu.matmul %36, %37, %cst_23 {dimension_numbers = #tpu.dot_dimension_numbers<[1], [0], [0], [1], [0, 0, 1, 1], [], []>} : vector<2x512xbf16>, vector<512x256xbf16>, vector<2x256xf32> -> vector<2x256xf32>
    %c0_24 = arith.constant 0 : index
    %c0_25 = arith.constant 0 : index
    %39 = vector.load %arg6[%c0_24, %c0_25] : memref<1x256xf32, #tpu.memory_space<vmem>>, vector<1x256xf32>
    %40 = vector.broadcast %39 : vector<1x256xf32> to vector<2x256xf32>
    %41 = arith.addf %38, %40 : vector<2x256xf32>
    %cst_26 = arith.constant 0.000000e+00 : f32
    %42 = vector.broadcast %cst_26 : f32 to vector<2x256xf32>
    %43 = arith.maximumf %41, %42 : vector<2x256xf32>
    %44 = arith.truncf %43 : vector<2x256xf32> to vector<2x256xbf16>
    %c0_27 = arith.constant 0 : index
    %c0_28 = arith.constant 0 : index
    %45 = vector.load %arg7[%c0_27, %c0_28] : memref<256x128xbf16, #tpu.memory_space<vmem>>, vector<256x128xbf16>
    %cst_29 = arith.constant dense<0.000000e+00> : vector<2x128xf32>
    %46 = tpu.matmul %44, %45, %cst_29 {dimension_numbers = #tpu.dot_dimension_numbers<[1], [0], [0], [1], [0, 0, 1, 1], [], []>} : vector<2x256xbf16>, vector<256x128xbf16>, vector<2x128xf32> -> vector<2x128xf32>
    %c0_30 = arith.constant 0 : index
    %c0_31 = arith.constant 0 : index
    %47 = vector.load %arg8[%c0_30, %c0_31] : memref<1x128xf32, #tpu.memory_space<vmem>>, vector<1x128xf32>
    %48 = vector.broadcast %47 : vector<1x128xf32> to vector<2x128xf32>
    %49 = arith.addf %46, %48 : vector<2x128xf32>
    %50 = tpu.iota {dimensions = array<i32: 1>} : vector<2x128xi32>
    %c10_i32 = arith.constant 10 : i32
    %51 = vector.broadcast %c10_i32 : i32 to vector<2x128xi32>
    %52 = arith.cmpi slt, %50, %51 : vector<2x128xi32>
    %cst_32 = arith.constant -1.000000e+30 : f32
    %53 = vector.broadcast %cst_32 : f32 to vector<2x128xf32>
    %54 = arith.select %52, %49, %53 : vector<2x128xi1>, vector<2x128xf32>
    %cst_33 = arith.constant dense<0xFF800000> : vector<2xf32>
    %55 = vector.multi_reduction <maximumf>, %54, %cst_33 [1] : vector<2x128xf32> to vector<2xf32>
    %56 = vector.shape_cast %55 : vector<2xf32> to vector<2x1xf32>
    %57 = vector.broadcast %56 : vector<2x1xf32> to vector<2x128xf32>
    %58 = arith.subf %54, %57 : vector<2x128xf32>
    %59 = math.exp %58 : vector<2x128xf32>
    %cst_34 = arith.constant dense<0.000000e+00> : vector<2xf32>
    %60 = vector.multi_reduction <add>, %59, %cst_34 [1] : vector<2x128xf32> to vector<2xf32>
    %61 = vector.shape_cast %60 : vector<2xf32> to vector<2x1xf32>
    %62 = tpu.reciprocal %61 {approx = true} : vector<2x1xf32> -> vector<2x1xf32>
    %63 = vector.broadcast %62 : vector<2x1xf32> to vector<2x128xf32>
    %64 = arith.mulf %59, %63 : vector<2x128xf32>
    %c0_35 = arith.constant 0 : index
    %c0_36 = arith.constant 0 : index
    %65 = vector.load %arg9[%c0_35, %c0_36] : memref<2x128xf32, #tpu.memory_space<vmem>>, vector<2x128xf32>
    tpu.vector_store %arg9[%c0_35, %c0_36], %64 {strides = array<i32>} : memref<2x128xf32, #tpu.memory_space<vmem>>, vector<2x128xf32>,
    return
  }
}

</mosaic_0001>

<llo_original>
// kernel: emoji_net_forward.1
$region0: #{emoji_net_forward.1}
  #allocation0 [shape = 'u32[]', space=smem, size = 0x4, offset = 0x4, fixed_abs, tag = 'smem constant byte address 0x4 - core index']
  #allocation1 [shape = 'u32[144,128]{1,0:T(1,128)}', space=vmem, size = 0x12000, scoped, tag = 'internal scratch']
  #allocation2 [shape = 'bf16[2,1024]{1,0:T(2,128)(2,1)}', space=vmem, size = 0x1000, scoped, tag = 'scratch operand']
  %s0 = inlined_call_operand.hbm [shape: f32[2,1000], index: 0, kind: input, shape index: {}]
  %s1 = inlined_call_operand.hbm [shape: f32[2,12], index: 1, kind: input, shape index: {}]
  %s2 = inlined_call_operand.hbm [shape: s8[1024,512], index: 2, kind: input, shape index: {}]
  %s3 = inlined_call_operand.vmem [shape: f32[1,512], index: 3, kind: input, shape index: {}]
  %s4 = inlined_call_operand.hbm [shape: f32[1,512], index: 4, kind: input, shape index: {}]
  %s5 = inlined_call_operand.hbm [shape: bf16[512,256], index: 5, kind: input, shape index: {}]
  %s6 = inlined_call_operand.vmem [shape: f32[1,256], index: 6, kind: input, shape index: {}]
  %s7 = inlined_call_operand.hbm [shape: bf16[256,128], index: 7, kind: input, shape index: {}]
  %s8 = inlined_call_operand.vmem [shape: f32[1,128], index: 8, kind: input, shape index: {}]
  %s9 = inlined_call_operand.hbm [shape: f32[2,128], index: 9, kind: output, shape index: {}]
  %s10 = sld [smem:[#allocation0]]
  $region70: #{emoji_net_forward.1} parent=0
    _
  %s12 = ssub.s32 1, %s10
  %s13 = scalar_select 0, %s12, %s10
  $region1: #{emoji_net_forward.1} parent=0
    #allocation3 [shape = 'u8[8192]{0}', space=vmem, size = 0x2000, scoped, tag = 'input window, operand 0, single buffered']
    #allocation4 [shape = 's32[1]{0}', space=sflag, size = 0x4, scoped, tag = 'scoped memory for emoji_net_forward.1']
    #allocation5 [shape = 's32[1]{0}', space=sflag, size = 0x4, scoped, tag = 'scoped memory for emoji_net_forward.1']
    #allocation6 [shape = 'u8[1024]{0}', space=vmem, size = 0x400, scoped, tag = 'input window, operand 1, single buffered']
    #allocation7 [shape = 's32[1]{0}', space=sflag, size = 0x4, scoped, tag = 'scoped memory for emoji_net_forward.1']
    #allocation8 [shape = 'u8[524288]{0}', space=vmem, size = 0x80000, scoped, tag = 'input window, operand 2, single buffered']
    #allocation9 [shape = 'u8[2048]{0}', space=vmem, size = 0x800, scoped, tag = 'input window, operand 4, single buffered']
    #allocation10 [shape = 's32[1]{0}', space=sflag, size = 0x4, scoped, tag = 'scoped memory for emoji_net_forward.1']
    #allocation11 [shape = 'u8[262144]{0}', space=vmem, size = 0x40000, scoped, tag = 'input window, operand 5, single buffered']
    #allocation12 [shape = 'u8[65536]{0}', space=vmem, size = 0x10000, scoped, tag = 'input window, operand 7, single buffered']
    #allocation13 [shape = 's32[1]{0}', space=sflag, size = 0x4, scoped, tag = 'scoped memory for emoji_net_forward.1']
    #allocation14 [shape = 'u8[1024]{0}', space=vmem, size = 0x400, scoped, tag = 'output window, operand 0, single buffered']
    %14 = vsyncpa [#allocation4], 0
    %15 = vsyncpa [#allocation7], 0
    %16 = vsyncpa [#allocation10], 0
    %17 = vsyncpa [#allocation13], 0
    %18 = vsyncpa [#allocation5], 0
    // Predicated region
    $region2: #{emoji_net_forward.1} parent=1 // pred_check
      _
    $region3: #{emoji_net_forward.1} parent=1 // pred_check_branch
      %20 = sbr.rel (0) target = $region5
    $region4: #{emoji_net_forward.1} parent=1 // pred_region
      %s22 = ssub.s32 256, 256
      %23 = vsyncadd [#allocation4], %s22
      %s25 = sshll.u32 [#allocation3], 4
      %s26 = int_to_ptr.vmem [resolvable:$true] %s25
      %28 = dma.hbm_to_vmem [thread:$0]  %s0, 256, %s26, [#allocation4]
    $region5: #{emoji_net_forward.1} parent=1 // pred_fallthru
      _
    // Predicated region
    $region6: #{emoji_net_forward.1} parent=1 // pred_check
      _
    $region7: #{emoji_net_forward.1} parent=1 // pred_check_branch
      %30 = sbr.rel (0) target = $region9
    $region8: #{emoji_net_forward.1} parent=1 // pred_region
      %s32 = ssub.s32 32, 32
      %33 = vsyncadd [#allocation7], %s32
      %s35 = sshll.u32 [#allocation6], 4
      %s36 = int_to_ptr.vmem [resolvable:$true] %s35
      %38 = dma.hbm_to_vmem [thread:$0]  %s1, 32, %s36, [#allocation7]
    $region9: #{emoji_net_forward.1} parent=1 // pred_fallthru
      _
    // Predicated region
    $region10: #{emoji_net_forward.1} parent=1 // pred_check
      _
    $region11: #{emoji_net_forward.1} parent=1 // pred_check_branch
      %40 = sbr.rel (0) target = $region13
    $region12: #{emoji_net_forward.1} parent=1 // pred_region
      %s42 = ssub.s32 16384, 16384
      %43 = vsyncadd [#allocation7], %s42
      %s44 = sshll.u32 [#allocation8], 4
      %s45 = int_to_ptr.vmem [resolvable:$true] %s44
      %50 = dma.hbm_to_vmem [thread:$0]  %s2, 16384, %s45, [#allocation7], 512, 512, 32
    $region13: #{emoji_net_forward.1} parent=1 // pred_fallthru
      _
    // Predicated region
    $region14: #{emoji_net_forward.1} parent=1 // pred_check
      _
    $region15: #{emoji_net_forward.1} parent=1 // pred_check_branch
      %52 = sbr.rel (0) target = $region17
    $region16: #{emoji_net_forward.1} parent=1 // pred_region
      _
    $region17: #{emoji_net_forward.1} parent=1 // pred_fallthru
      _
    // Predicated region
    $region18: #{emoji_net_forward.1} parent=1 // pred_check
      _
    $region19: #{emoji_net_forward.1} parent=1 // pred_check_branch
      %54 = sbr.rel (0) target = $region21
    $region20: #{emoji_net_forward.1} parent=1 // pred_region
      %s56 = ssub.s32 64, 64
      %57 = vsyncadd [#allocation10], %s56
      %s59 = sshll.u32 [#allocation9], 4
      %s60 = int_to_ptr.vmem [resolvable:$true] %s59
      %62 = dma.hbm_to_vmem [thread:$0]  %s4, 64, %s60, [#allocation10]
    $region21: #{emoji_net_forward.1} parent=1 // pred_fallthru
      _
    // Predicated region
    $region22: #{emoji_net_forward.1} parent=1 // pred_check
      _
    $region23: #{emoji_net_forward.1} parent=1 // pred_check_branch
      %64 = sbr.rel (0) target = $region25
    $region24: #{emoji_net_forward.1} parent=1 // pred_region
      %s66 = ssub.s32 8192, 8192
      %67 = vsyncadd [#allocation10], %s66
      %s68 = sshll.u32 [#allocation11], 4
      %s69 = int_to_ptr.vmem [resolvable:$true] %s68
      %74 = dma.hbm_to_vmem [thread:$0]  %s5, 8192, %s69, [#allocation10], 128, 128, 8
    $region25: #{emoji_net_forward.1} parent=1 // pred_fallthru
      _
    // Predicated region
    $region26: #{emoji_net_forward.1} parent=1 // pred_check
      _
    $region27: #{emoji_net_forward.1} parent=1 // pred_check_branch
      %76 = sbr.rel (0) target = $region29
    $region28: #{emoji_net_forward.1} parent=1 // pred_region
      _
    $region29: #{emoji_net_forward.1} parent=1 // pred_fallthru
      _
    // Predicated region
    $region30: #{emoji_net_forward.1} parent=1 // pred_check
      _
    $region31: #{emoji_net_forward.1} parent=1 // pred_check_branch
      %78 = sbr.rel (0) target = $region33
    $region32: #{emoji_net_forward.1} parent=1 // pred_region
      %s80 = ssub.s32 2048, 2048
      %81 = vsyncadd [#allocation13], %s80
      %s82 = sshll.u32 [#allocation12], 4
      %s83 = int_to_ptr.vmem [resolvable:$true] %s82
      %88 = dma.hbm_to_vmem [thread:$0]  %s7, 2048, %s83, [#allocation13], 64, 64, 4
    $region33: #{emoji_net_forward.1} parent=1 // pred_fallthru
      _
    // Predicated region
    $region34: #{emoji_net_forward.1} parent=1 // pred_check
      _
    $region35: #{emoji_net_forward.1} parent=1 // pred_check_branch
      %90 = sbr.rel (0) target = $region37
    $region36: #{emoji_net_forward.1} parent=1 // pred_region
      _
    $region37: #{emoji_net_forward.1} parent=1 // pred_fallthru
      _
    // Predicated region
    $region38: #{emoji_net_forward.1} parent=1 // pred_check
      _
    $region39: #{emoji_net_forward.1} parent=1 // pred_check_branch
      %92 = sbr.rel (0) target = $region41
    $region40: #{emoji_net_forward.1} parent=1 // pred_region
      %93 = dma.done [#allocation4], 256
    $region41: #{emoji_net_forward.1} parent=1 // pred_fallthru
      _
    // Predicated region
    $region42: #{emoji_net_forward.1} parent=1 // pred_check
      _
    $region43: #{emoji_net_forward.1} parent=1 // pred_check_branch
      %95 = sbr.rel (0) target = $region45
    $region44: #{emoji_net_forward.1} parent=1 // pred_region
      %96 = dma.done [#allocation7], 32
    $region45: #{emoji_net_forward.1} parent=1 // pred_fallthru
      _
    // Predicated region
    $region46: #{emoji_net_forward.1} parent=1 // pred_check
      _
    $region47: #{emoji_net_forward.1} parent=1 // pred_check_branch
      %98 = sbr.rel (0) target = $region49
    $region48: #{emoji_net_forward.1} parent=1 // pred_region
      %99 = dma.done [#allocation7], 16384
    $region49: #{emoji_net_forward.1} parent=1 // pred_fallthru
      _
    // Predicated region
    $region50: #{emoji_net_forward.1} parent=1 // pred_check
      _
    $region51: #{emoji_net_forward.1} parent=1 // pred_check_branch
      %101 = sbr.rel (0) target = $region53
    $region52: #{emoji_net_forward.1} parent=1 // pred_region
      %102 = dma.done [#allocation10], 64
    $region53: #{emoji_net_forward.1} parent=1 // pred_fallthru
      _
    // Predicated region
    $region54: #{emoji_net_forward.1} parent=1 // pred_check
      _
    $region55: #{emoji_net_forward.1} parent=1 // pred_check_branch
      %104 = sbr.rel (0) target = $region57
    $region56: #{emoji_net_forward.1} parent=1 // pred_region
      %105 = dma.done [#allocation10], 8192
    $region57: #{emoji_net_forward.1} parent=1 // pred_fallthru
      _
    // Predicated region
    $region58: #{emoji_net_forward.1} parent=1 // pred_check
      _
    $region59: #{emoji_net_forward.1} parent=1 // pred_check_branch
      %107 = sbr.rel (0) target = $region61
    $region60: #{emoji_net_forward.1} parent=1 // pred_region
      %108 = dma.done [#allocation13], 2048
    $region61: #{emoji_net_forward.1} parent=1 // pred_fallthru
      _
    %v110 = vld [vmem:[#allocation3] sm:$0xff]
    %v111 = vld [vmem:[#allocation3 + $0x8] sm:$0xff]
    %v114 = vcombine.high %v110, %v110
    %v116 = vunpack.c.l.s4 1983009808
    %v117 = vunpack.c.0.s8 %v116
    %v118 = vlaneseq
    %v119 = vshrl.u32 %v118, 7
    %v120 = vsub.s32 %v117, %v119
    %v121 = vrot.slane %v110, %v120
    %v123 = vunpack.c.l.s4 1983009808
    %v124 = vunpack.c.0.s8 %v123
    %v125 = vlaneseq
    %v126 = vshrl.u32 %v125, 7
    %v127 = vsub.s32 %v124, %v126
    %v128 = vrot.slane %v114, %v127
    %v129 = vcombine.high %v121, %v121
    %v130 = vcombine.high %v128, %v128
    %v131 = vcombine.high %v111, %v111
    %v133 = vunpack.c.l.s4 1983009808
    %v134 = vunpack.c.0.s8 %v133
    %v135 = vlaneseq
    %v136 = vshrl.u32 %v135, 7
    %v137 = vsub.s32 %v134, %v136
    %v138 = vrot.slane %v111, %v137
    %v140 = vunpack.c.l.s4 1983009808
    %v141 = vunpack.c.0.s8 %v140
    %v142 = vlaneseq
    %v143 = vshrl.u32 %v142, 7
    %v144 = vsub.s32 %v141, %v143
    %v145 = vrot.slane %v131, %v144
    %v146 = vcombine.high %v138, %v138
    %v147 = vcombine.high %v145, %v145
    %v156 = vpack.c.bf16 %v121, %v121
    %v157 = vpack.c.bf16 %v129, %v129
    %v158 = vpack.c.bf16 %v128, %v128
    %v159 = vpack.c.bf16 %v130, %v130
    %v160 = vpack.c.bf16 %v138, %v138
    %v161 = vpack.c.bf16 %v146, %v146
    %v162 = vpack.c.bf16 %v145, %v145
    %v163 = vpack.c.bf16 %v147, %v147
    %v172 = vcombine.low %v156, %v157
    %v173 = vcombine.low %v158, %v159
    %v174 = vcombine.low %v160, %v161
    %v175 = vcombine.low %v162, %v163
    %v177 = vunpack.c.l.s4 1966171168
    %v178 = vunpack.c.0.s8 %v177
    %v179 = vlaneseq
    %v180 = vshrl.u32 %v179, 7
    %v181 = vsub.s32 %v178, %v180
    %v182 = vrot.slane %v172, %v181
    %v184 = vunpack.c.l.s4 1966171168
    %v185 = vunpack.c.0.s8 %v184
    %v186 = vlaneseq
    %v187 = vshrl.u32 %v186, 7
    %v188 = vsub.s32 %v185, %v187
    %v189 = vrot.slane %v173, %v188
    %v191 = vunpack.c.l.s4 1966171168
    %v192 = vunpack.c.0.s8 %v191
    %v193 = vlaneseq
    %v194 = vshrl.u32 %v193, 7
    %v195 = vsub.s32 %v192, %v194
    %v196 = vrot.slane %v174, %v195
    %v198 = vunpack.c.l.s4 1966171168
    %v199 = vunpack.c.0.s8 %v198
    %v200 = vlaneseq
    %v201 = vshrl.u32 %v200, 7
    %v202 = vsub.s32 %v199, %v201
    %v203 = vrot.slane %v175, %v202
    %v204 = vcombine.low %v182, %v189
    %v205 = vcombine.low %v196, %v203
    %v207 = vunpack.c.l.s4 1966171168
    %v208 = vunpack.c.0.s8 %v207
    %v209 = vlaneseq
    %v210 = vshrl.u32 %v209, 7
    %v211 = vsub.s32 %v208, %v210
    %v212 = vrot.slane %v204, %v211
    %v214 = vunpack.c.l.s4 1966171168
    %v215 = vunpack.c.0.s8 %v214
    %v216 = vlaneseq
    %v217 = vshrl.u32 %v216, 7
    %v218 = vsub.s32 %v215, %v217
    %v219 = vrot.slane %v205, %v218
    %v220 = vcombine.low %v212, %v219
    %vm222 = vcmask 1040384
    %vm223 = vcmask 1041409
    %vm224 = vmor %vm223, %vm222
    %vm225 = vcmask 1042434
    %vm226 = vmor %vm225, %vm224
    %vm227 = vcmask 1043459
    %vm228 = vmor %vm227, %vm226
    %vm229 = vcmask 1044484
    %vm230 = vmor %vm229, %vm228
    %vm231 = vcmask 1045509
    %vm232 = vmor %vm231, %vm230
    %vm233 = vcmask 1046534
    %vm234 = vmor %vm233, %vm232
    %vm235 = vcmask 850951
    %vm236 = vmor %vm235, %vm234
    %237 = vst.msk [vmem:[#allocation2] sm:$0xff] %vm236, %v220
    %v238 = vld [vmem:[#allocation6] sm:$0x3]
    %v239 = vpack.c.bf16 %v238, %v238
    %v242 = vunpack.c.l.s4 1966171168
    %v243 = vunpack.c.0.s8 %v242
    %v244 = vlaneseq
    %v245 = vshrl.u32 %v244, 7
    %v246 = vsub.s32 %v243, %v245
    %v247 = vrot.slane %v239, %v246
    %v249 = vunpack.c.l.s4 1966171168
    %v250 = vunpack.c.0.s8 %v249
    %v251 = vlaneseq
    %v252 = vshrl.u32 %v251, 7
    %v253 = vsub.s32 %v250, %v252
    %v254 = vrot.slane %v247, %v253
    %255 = vrot.lane.b32.xlu0 %v254, 104
    %v256 = vpop.permute.xlu0 %255
    %vm258 = vcmask 942912
    %259 = vst.msk [vmem:[#allocation2 + $0x7] sm:$0x1] %vm258, %v256
    %vm260 = vcmask 1041312
    %261 = vst.msk [vmem:[#allocation2 + $0x7] sm:$0x1] %vm260, 0
    %v262 = vld [vmem:[#allocation2] sm:$0xff]
    %v263 = vld [vmem:[#allocation8] sm:$0xff]
    %v264 = vld [vmem:[#allocation8 + $0x8] sm:$0xff]
    %v265 = vld [vmem:[#allocation8 + $0x10] sm:$0xff]
    %v266 = vld [vmem:[#allocation8 + $0x18] sm:$0xff]
    %v267 = vld [vmem:[#allocation8 + $0x20] sm:$0xff]
    %v268 = vld [vmem:[#allocation8 + $0x28] sm:$0xff]
    %v269 = vld [vmem:[#allocation8 + $0x30] sm:$0xff]
    %v270 = vld [vmem:[#allocation8 + $0x38] sm:$0xff]
    %v271 = vld [vmem:[#allocation8 + $0x40] sm:$0xff]
    %v272 = vld [vmem:[#allocation8 + $0x48] sm:$0xff]
    %v273 = vld [vmem:[#allocation8 + $0x50] sm:$0xff]
    %v274 = vld [vmem:[#allocation8 + $0x58] sm:$0xff]
    %v275 = vld [vmem:[#allocation8 + $0x60] sm:$0xff]
    %v276 = vld [vmem:[#allocation8 + $0x68] sm:$0xff]
    %v277 = vld [vmem:[#allocation8 + $0x70] sm:$0xff]
    %v278 = vld [vmem:[#allocation8 + $0x78] sm:$0xff]
    %v279 = vld [vmem:[#allocation8 + $0x80] sm:$0xff]
    %v280 = vld [vmem:[#allocation8 + $0x88] sm:$0xff]
    %v281 = vld [vmem:[#allocation8 + $0x90] sm:$0xff]
    %v282 = vld [vmem:[#allocation8 + $0x98] sm:$0xff]
    %v283 = vld [vmem:[#allocation8 + $0xa0] sm:$0xff]
    %v284 = vld [vmem:[#allocation8 + $0xa8] sm:$0xff]
    %v285 = vld [vmem:[#allocation8 + $0xb0] sm:$0xff]
    %v286 = vld [vmem:[#allocation8 + $0xb8] sm:$0xff]
    %v287 = vld [vmem:[#allocation8 + $0xc0] sm:$0xff]
    %v288 = vld [vmem:[#allocation8 + $0xc8] sm:$0xff]
    %v289 = vld [vmem:[#allocation8 + $0xd0] sm:$0xff]
    %v290 = vld [vmem:[#allocation8 + $0xd8] sm:$0xff]
    %v291 = vld [vmem:[#allocation8 + $0xe0] sm:$0xff]
    %v292 = vld [vmem:[#allocation8 + $0xe8] sm:$0xff]
    %v293 = vld [vmem:[#allocation8 + $0xf0] sm:$0xff]
    %v294 = vld [vmem:[#allocation8 + $0xf8] sm:$0xff]
    %v295 = vld [vmem:[#allocation8 + $0x100] sm:$0xff]
    %v296 = vld [vmem:[#allocation8 + $0x108] sm:$0xff]
    %v297 = vld [vmem:[#allocation8 + $0x110] sm:$0xff]
    %v298 = vld [vmem:[#allocation8 + $0x118] sm:$0xff]
    %v299 = vld [vmem:[#allocation8 + $0x120] sm:$0xff]
    %v300 = vld [vmem:[#allocation8 + $0x128] sm:$0xff]
    %v301 = vld [vmem:[#allocation8 + $0x130] sm:$0xff]
    %v302 = vld [vmem:[#allocation8 + $0x138] sm:$0xff]
    %v303 = vld [vmem:[#allocation8 + $0x140] sm:$0xff]
    %v304 = vld [vmem:[#allocation8 + $0x148] sm:$0xff]
    %v305 = vld [vmem:[#allocation8 + $0x150] sm:$0xff]
    %v306 = vld [vmem:[#allocation8 + $0x158] sm:$0xff]
    %v307 = vld [vmem:[#allocation8 + $0x160] sm:$0xff]
    %v308 = vld [vmem:[#allocation8 + $0x168] sm:$0xff]
    %v309 = vld [vmem:[#allocation8 + $0x170] sm:$0xff]
    %v310 = vld [vmem:[#allocation8 + $0x178] sm:$0xff]
    %v311 = vld [vmem:[#allocation8 + $0x180] sm:$0xff]
    %v312 = vld [vmem:[#allocation8 + $0x188] sm:$0xff]
    %v313 = vld [vmem:[#allocation8 + $0x190] sm:$0xff]
    %v314 = vld [vmem:[#allocation8 + $0x198] sm:$0xff]
    %v315 = vld [vmem:[#allocation8 + $0x1a0] sm:$0xff]
    %v316 = vld [vmem:[#allocation8 + $0x1a8] sm:$0xff]
    %v317 = vld [vmem:[#allocation8 + $0x1b0] sm:$0xff]
    %v318 = vld [vmem:[#allocation8 + $0x1b8] sm:$0xff]
    %v319 = vld [vmem:[#allocation8 + $0x1c0] sm:$0xff]
    %v320 = vld [vmem:[#allocation8 + $0x1c8] sm:$0xff]
    %v321 = vld [vmem:[#allocation8 + $0x1d0] sm:$0xff]
    %v322 = vld [vmem:[#allocation8 + $0x1d8] sm:$0xff]
    %v323 = vld [vmem:[#allocation8 + $0x1e0] sm:$0xff]
    %v324 = vld [vmem:[#allocation8 + $0x1e8] sm:$0xff]
    %v325 = vld [vmem:[#allocation8 + $0x1f0] sm:$0xff]
    %v326 = vld [vmem:[#allocation8 + $0x1f8] sm:$0xff]
    %v327 = vld [vmem:[#allocation8 + $0x200] sm:$0xff]
    %v328 = vld [vmem:[#allocation8 + $0x208] sm:$0xff]
    %v329 = vld [vmem:[#allocation8 + $0x210] sm:$0xff]
    %v330 = vld [vmem:[#allocation8 + $0x218] sm:$0xff]
    %v331 = vld [vmem:[#allocation8 + $0x220] sm:$0xff]
    %v332 = vld [vmem:[#allocation8 + $0x228] sm:$0xff]
    %v333 = vld [vmem:[#allocation8 + $0x230] sm:$0xff]
    %v334 = vld [vmem:[#allocation8 + $0x238] sm:$0xff]
    %v335 = vld [vmem:[#allocation8 + $0x240] sm:$0xff]
    %v336 = vld [vmem:[#allocation8 + $0x248] sm:$0xff]
    %v337 = vld [vmem:[#allocation8 + $0x250] sm:$0xff]
    %v338 = vld [vmem:[#allocation8 + $0x258] sm:$0xff]
    %v339 = vld [vmem:[#allocation8 + $0x260] sm:$0xff]
    %v340 = vld [vmem:[#allocation8 + $0x268] sm:$0xff]
    %v341 = vld [vmem:[#allocation8 + $0x270] sm:$0xff]
    %v342 = vld [vmem:[#allocation8 + $0x278] sm:$0xff]
    %v343 = vld [vmem:[#allocation8 + $0x280] sm:$0xff]
    %v344 = vld [vmem:[#allocation8 + $0x288] sm:$0xff]
    %v345 = vld [vmem:[#allocation8 + $0x290] sm:$0xff]
    %v346 = vld [vmem:[#allocation8 + $0x298] sm:$0xff]
    %v347 = vld [vmem:[#allocation8 + $0x2a0] sm:$0xff]
    %v348 = vld [vmem:[#allocation8 + $0x2a8] sm:$0xff]
    %v349 = vld [vmem:[#allocation8 + $0x2b0] sm:$0xff]
    %v350 = vld [vmem:[#allocation8 + $0x2b8] sm:$0xff]
    %v351 = vld [vmem:[#allocation8 + $0x2c0] sm:$0xff]
    %v352 = vld [vmem:[#allocation8 + $0x2c8] sm:$0xff]
    %v353 = vld [vmem:[#allocation8 + $0x2d0] sm:$0xff]
    %v354 = vld [vmem:[#allocation8 + $0x2d8] sm:$0xff]
    %v355 = vld [vmem:[#allocation8 + $0x2e0] sm:$0xff]
    %v356 = vld [vmem:[#allocation8 + $0x2e8] sm:$0xff]
    %v357 = vld [vmem:[#allocation8 + $0x2f0] sm:$0xff]
    %v358 = vld [vmem:[#allocation8 + $0x2f8] sm:$0xff]
    %v359 = vld [vmem:[#allocation8 + $0x300] sm:$0xff]
    %v360 = vld [vmem:[#allocation8 + $0x308] sm:$0xff]
    %v361 = vld [vmem:[#allocation8 + $0x310] sm:$0xff]
    %v362 = vld [vmem:[#allocation8 + $0x318] sm:$0xff]
    %v363 = vld [vmem:[#allocation8 + $0x320] sm:$0xff]
    %v364 = vld [vmem:[#allocation8 + $0x328] sm:$0xff]
    %v365 = vld [vmem:[#allocation8 + $0x330] sm:$0xff]
    %v366 = vld [vmem:[#allocation8 + $0x338] sm:$0xff]
    %v367 = vld [vmem:[#allocation8 + $0x340] sm:$0xff]
    %v368 = vld [vmem:[#allocation8 + $0x348] sm:$0xff]
    %v369 = vld [vmem:[#allocation8 + $0x350] sm:$0xff]
    %v370 = vld [vmem:[#allocation8 + $0x358] sm:$0xff]
    %v371 = vld [vmem:[#allocation8 + $0x360] sm:$0xff]
    %v372 = vld [vmem:[#allocation8 + $0x368] sm:$0xff]
    %v373 = vld [vmem:[#allocation8 + $0x370] sm:$0xff]
    %v374 = vld [vmem:[#allocation8 + $0x378] sm:$0xff]
    %v375 = vld [vmem:[#allocation8 + $0x380] sm:$0xff]
    %v376 = vld [vmem:[#allocation8 + $0x388] sm:$0xff]
    %v377 = vld [vmem:[#allocation8 + $0x390] sm:$0xff]
    %v378 = vld [vmem:[#allocation8 + $0x398] sm:$0xff]
    %v379 = vld [vmem:[#allocation8 + $0x3a0] sm:$0xff]
    %v380 = vld [vmem:[#allocation8 + $0x3a8] sm:$0xff]
    %v381 = vld [vmem:[#allocation8 + $0x3b0] sm:$0xff]
    %v382 = vld [vmem:[#allocation8 + $0x3b8] sm:$0xff]
    %v383 = vld [vmem:[#allocation8 + $0x3c0] sm:$0xff]
    %v384 = vld [vmem:[#allocation8 + $0x3c8] sm:$0xff]
    %v385 = vld [vmem:[#allocation8 + $0x3d0] sm:$0xff]
    %v386 = vld [vmem:[#allocation8 + $0x3d8] sm:$0xff]
    %v387 = vld [vmem:[#allocation8 + $0x3e0] sm:$0xff]
    %v388 = vld [vmem:[#allocation8 + $0x3e8] sm:$0xff]
    %v389 = vld [vmem:[#allocation8 + $0x3f0] sm:$0xff]
    %v390 = vld [vmem:[#allocation8 + $0x3f8] sm:$0xff]
    %v391 = vunpack.c.l.s8.bf16 %v263
    %v392 = vunpack.c.l.s8.bf16 %v264
    %v393 = vunpack.c.l.s8.bf16 %v265
    %v394 = vunpack.c.l.s8.bf16 %v266
    %v395 = vunpack.c.h.s8.bf16 %v263
    %v396 = vunpack.c.h.s8.bf16 %v264
    %v397 = vunpack.c.h.s8.bf16 %v265
    %v398 = vunpack.c.h.s8.bf16 %v266
    %v399 = vunpack.c.l.s8.bf16 %v267
    %v400 = vunpack.c.l.s8.bf16 %v268
    %v401 = vunpack.c.l.s8.bf16 %v269
    %v402 = vunpack.c.l.s8.bf16 %v270
    %v403 = vunpack.c.h.s8.bf16 %v267
    %v404 = vunpack.c.h.s8.bf16 %v268
    %v405 = vunpack.c.h.s8.bf16 %v269
    %v406 = vunpack.c.h.s8.bf16 %v270
    %v407 = vunpack.c.l.s8.bf16 %v271
    %v408 = vunpack.c.l.s8.bf16 %v272
    %v409 = vunpack.c.l.s8.bf16 %v273
    %v410 = vunpack.c.l.s8.bf16 %v274
    %v411 = vunpack.c.h.s8.bf16 %v271
    %v412 = vunpack.c.h.s8.bf16 %v272
    %v413 = vunpack.c.h.s8.bf16 %v273
    %v414 = vunpack.c.h.s8.bf16 %v274
    %v415 = vunpack.c.l.s8.bf16 %v275
    %v416 = vunpack.c.l.s8.bf16 %v276
    %v417 = vunpack.c.l.s8.bf16 %v277
    %v418 = vunpack.c.l.s8.bf16 %v278
    %v419 = vunpack.c.h.s8.bf16 %v275
    %v420 = vunpack.c.h.s8.bf16 %v276
    %v421 = vunpack.c.h.s8.bf16 %v277
    %v422 = vunpack.c.h.s8.bf16 %v278
    %v423 = vunpack.c.l.s8.bf16 %v279
    %v424 = vunpack.c.l.s8.bf16 %v280
    %v425 = vunpack.c.l.s8.bf16 %v281
    %v426 = vunpack.c.l.s8.bf16 %v282
    %v427 = vunpack.c.h.s8.bf16 %v279
    %v428 = vunpack.c.h.s8.bf16 %v280
    %v429 = vunpack.c.h.s8.bf16 %v281
    %v430 = vunpack.c.h.s8.bf16 %v282
    %v431 = vunpack.c.l.s8.bf16 %v283
    %v432 = vunpack.c.l.s8.bf16 %v284
    %v433 = vunpack.c.l.s8.bf16 %v285
    %v434 = vunpack.c.l.s8.bf16 %v286
    %v435 = vunpack.c.h.s8.bf16 %v283
    %v436 = vunpack.c.h.s8.bf16 %v284
    %v437 = vunpack.c.h.s8.bf16 %v285
    %v438 = vunpack.c.h.s8.bf16 %v286
    %v439 = vunpack.c.l.s8.bf16 %v287
    %v440 = vunpack.c.l.s8.bf16 %v288
    %v441 = vunpack.c.l.s8.bf16 %v289
    %v442 = vunpack.c.l.s8.bf16 %v290
    %v443 = vunpack.c.h.s8.bf16 %v287
    %v444 = vunpack.c.h.s8.bf16 %v288
    %v445 = vunpack.c.h.s8.bf16 %v289
    %v446 = vunpack.c.h.s8.bf16 %v290
    %v447 = vunpack.c.l.s8.bf16 %v291
    %v448 = vunpack.c.l.s8.bf16 %v292
    %v449 = vunpack.c.l.s8.bf16 %v293
    %v450 = vunpack.c.l.s8.bf16 %v294
    %v451 = vunpack.c.h.s8.bf16 %v291
    %v452 = vunpack.c.h.s8.bf16 %v292
    %v453 = vunpack.c.h.s8.bf16 %v293
    %v454 = vunpack.c.h.s8.bf16 %v294
    %v455 = vunpack.c.l.s8.bf16 %v295
    %v456 = vunpack.c.l.s8.bf16 %v296
    %v457 = vunpack.c.l.s8.bf16 %v297
    %v458 = vunpack.c.l.s8.bf16 %v298
    %v459 = vunpack.c.h.s8.bf16 %v295
    %v460 = vunpack.c.h.s8.bf16 %v296
    %v461 = vunpack.c.h.s8.bf16 %v297
    %v462 = vunpack.c.h.s8.bf16 %v298
    %v463 = vunpack.c.l.s8.bf16 %v299
    %v464 = vunpack.c.l.s8.bf16 %v300
    %v465 = vunpack.c.l.s8.bf16 %v301
    %v466 = vunpack.c.l.s8.bf16 %v302
    %v467 = vunpack.c.h.s8.bf16 %v299
    %v468 = vunpack.c.h.s8.bf16 %v300
    %v469 = vunpack.c.h.s8.bf16 %v301
    %v470 = vunpack.c.h.s8.bf16 %v302
    %v471 = vunpack.c.l.s8.bf16 %v303
    %v472 = vunpack.c.l.s8.bf16 %v304
    %v473 = vunpack.c.l.s8.bf16 %v305
    %v474 = vunpack.c.l.s8.bf16 %v306
    %v475 = vunpack.c.h.s8.bf16 %v303
    %v476 = vunpack.c.h.s8.bf16 %v304
    %v477 = vunpack.c.h.s8.bf16 %v305
    %v478 = vunpack.c.h.s8.bf16 %v306
    %v479 = vunpack.c.l.s8.bf16 %v307
    %v480 = vunpack.c.l.s8.bf16 %v308
    %v481 = vunpack.c.l.s8.bf16 %v309
    %v482 = vunpack.c.l.s8.bf16 %v310
    %v483 = vunpack.c.h.s8.bf16 %v307
    %v484 = vunpack.c.h.s8.bf16 %v308
    %v485 = vunpack.c.h.s8.bf16 %v309
    %v486 = vunpack.c.h.s8.bf16 %v310
    %v487 = vunpack.c.l.s8.bf16 %v311
    %v488 = vunpack.c.l.s8.bf16 %v312
    %v489 = vunpack.c.l.s8.bf16 %v313
    %v490 = vunpack.c.l.s8.bf16 %v314
    %v491 = vunpack.c.h.s8.bf16 %v311
    %v492 = vunpack.c.h.s8.bf16 %v312
    %v493 = vunpack.c.h.s8.bf16 %v313
    %v494 = vunpack.c.h.s8.bf16 %v314
    %v495 = vunpack.c.l.s8.bf16 %v315
    %v496 = vunpack.c.l.s8.bf16 %v316
    %v497 = vunpack.c.l.s8.bf16 %v317
    %v498 = vunpack.c.l.s8.bf16 %v318
    %v499 = vunpack.c.h.s8.bf16 %v315
    %v500 = vunpack.c.h.s8.bf16 %v316
    %v501 = vunpack.c.h.s8.bf16 %v317
    %v502 = vunpack.c.h.s8.bf16 %v318
    %v503 = vunpack.c.l.s8.bf16 %v319
    %v504 = vunpack.c.l.s8.bf16 %v320
    %v505 = vunpack.c.l.s8.bf16 %v321
    %v506 = vunpack.c.l.s8.bf16 %v322
    %v507 = vunpack.c.h.s8.bf16 %v319
    %v508 = vunpack.c.h.s8.bf16 %v320
    %v509 = vunpack.c.h.s8.bf16 %v321
    %v510 = vunpack.c.h.s8.bf16 %v322
    %v511 = vunpack.c.l.s8.bf16 %v323
    %v512 = vunpack.c.l.s8.bf16 %v324
    %v513 = vunpack.c.l.s8.bf16 %v325
    %v514 = vunpack.c.l.s8.bf16 %v326
    %v515 = vunpack.c.h.s8.bf16 %v323
    %v516 = vunpack.c.h.s8.bf16 %v324
    %v517 = vunpack.c.h.s8.bf16 %v325
    %v518 = vunpack.c.h.s8.bf16 %v326
    %v519 = vunpack.c.l.s8.bf16 %v327
    %v520 = vunpack.c.l.s8.bf16 %v328
    %v521 = vunpack.c.l.s8.bf16 %v329
    %v522 = vunpack.c.l.s8.bf16 %v330
    %v523 = vunpack.c.h.s8.bf16 %v327
    %v524 = vunpack.c.h.s8.bf16 %v328
    %v525 = vunpack.c.h.s8.bf16 %v329
    %v526 = vunpack.c.h.s8.bf16 %v330
    %v527 = vunpack.c.l.s8.bf16 %v331
    %v528 = vunpack.c.l.s8.bf16 %v332
    %v529 = vunpack.c.l.s8.bf16 %v333
    %v530 = vunpack.c.l.s8.bf16 %v334
    %v531 = vunpack.c.h.s8.bf16 %v331
    %v532 = vunpack.c.h.s8.bf16 %v332
    %v533 = vunpack.c.h.s8.bf16 %v333
    %v534 = vunpack.c.h.s8.bf16 %v334
    %v535 = vunpack.c.l.s8.bf16 %v335
    %v536 = vunpack.c.l.s8.bf16 %v336
    %v537 = vunpack.c.l.s8.bf16 %v337
    %v538 = vunpack.c.l.s8.bf16 %v338
    %v539 = vunpack.c.h.s8.bf16 %v335
    %v540 = vunpack.c.h.s8.bf16 %v336
    %v541 = vunpack.c.h.s8.bf16 %v337
    %v542 = vunpack.c.h.s8.bf16 %v338
    %v543 = vunpack.c.l.s8.bf16 %v339
    %v544 = vunpack.c.l.s8.bf16 %v340
    %v545 = vunpack.c.l.s8.bf16 %v341
    %v546 = vunpack.c.l.s8.bf16 %v342
    %v547 = vunpack.c.h.s8.bf16 %v339
    %v548 = vunpack.c.h.s8.bf16 %v340
    %v549 = vunpack.c.h.s8.bf16 %v341
    %v550 = vunpack.c.h.s8.bf16 %v342
    %v551 = vunpack.c.l.s8.bf16 %v343
    %v552 = vunpack.c.l.s8.bf16 %v344
    %v553 = vunpack.c.l.s8.bf16 %v345
    %v554 = vunpack.c.l.s8.bf16 %v346
    %v555 = vunpack.c.h.s8.bf16 %v343
    %v556 = vunpack.c.h.s8.bf16 %v344
    %v557 = vunpack.c.h.s8.bf16 %v345
    %v558 = vunpack.c.h.s8.bf16 %v346
    %v559 = vunpack.c.l.s8.bf16 %v347
    %v560 = vunpack.c.l.s8.bf16 %v348
    %v561 = vunpack.c.l.s8.bf16 %v349
    %v562 = vunpack.c.l.s8.bf16 %v350
    %v563 = vunpack.c.h.s8.bf16 %v347
    %v564 = vunpack.c.h.s8.bf16 %v348
    %v565 = vunpack.c.h.s8.bf16 %v349
    %v566 = vunpack.c.h.s8.bf16 %v350
    %v567 = vunpack.c.l.s8.bf16 %v351
    %v568 = vunpack.c.l.s8.bf16 %v352
    %v569 = vunpack.c.l.s8.bf16 %v353
    %v570 = vunpack.c.l.s8.bf16 %v354
    %v571 = vunpack.c.h.s8.bf16 %v351
    %v572 = vunpack.c.h.s8.bf16 %v352
    %v573 = vunpack.c.h.s8.bf16 %v353
    %v574 = vunpack.c.h.s8.bf16 %v354
    %v575 = vunpack.c.l.s8.bf16 %v355
    %v576 = vunpack.c.l.s8.bf16 %v356
    %v577 = vunpack.c.l.s8.bf16 %v357
    %v578 = vunpack.c.l.s8.bf16 %v358
    %v579 = vunpack.c.h.s8.bf16 %v355
    %v580 = vunpack.c.h.s8.bf16 %v356
    %v581 = vunpack.c.h.s8.bf16 %v357
    %v582 = vunpack.c.h.s8.bf16 %v358
    %v583 = vunpack.c.l.s8.bf16 %v359
    %v584 = vunpack.c.l.s8.bf16 %v360
    %v585 = vunpack.c.l.s8.bf16 %v361
    %v586 = vunpack.c.l.s8.bf16 %v362
    %v587 = vunpack.c.h.s8.bf16 %v359
    %v588 = vunpack.c.h.s8.bf16 %v360
    %v589 = vunpack.c.h.s8.bf16 %v361
    %v590 = vunpack.c.h.s8.bf16 %v362
    %v591 = vunpack.c.l.s8.bf16 %v363
    %v592 = vunpack.c.l.s8.bf16 %v364
    %v593 = vunpack.c.l.s8.bf16 %v365
    %v594 = vunpack.c.l.s8.bf16 %v366
    %v595 = vunpack.c.h.s8.bf16 %v363
    %v596 = vunpack.c.h.s8.bf16 %v364
    %v597 = vunpack.c.h.s8.bf16 %v365
    %v598 = vunpack.c.h.s8.bf16 %v366
    %v599 = vunpack.c.l.s8.bf16 %v367
    %v600 = vunpack.c.l.s8.bf16 %v368
    %v601 = vunpack.c.l.s8.bf16 %v369
    %v602 = vunpack.c.l.s8.bf16 %v370
    %v603 = vunpack.c.h.s8.bf16 %v367
    %v604 = vunpack.c.h.s8.bf16 %v368
    %v605 = vunpack.c.h.s8.bf16 %v369
    %v606 = vunpack.c.h.s8.bf16 %v370
    %v607 = vunpack.c.l.s8.bf16 %v371
    %v608 = vunpack.c.l.s8.bf16 %v372
    %v609 = vunpack.c.l.s8.bf16 %v373
    %v610 = vunpack.c.l.s8.bf16 %v374
    %v611 = vunpack.c.h.s8.bf16 %v371
    %v612 = vunpack.c.h.s8.bf16 %v372
    %v613 = vunpack.c.h.s8.bf16 %v373
    %v614 = vunpack.c.h.s8.bf16 %v374
    %v615 = vunpack.c.l.s8.bf16 %v375
    %v616 = vunpack.c.l.s8.bf16 %v376
    %v617 = vunpack.c.l.s8.bf16 %v377
    %v618 = vunpack.c.l.s8.bf16 %v378
    %v619 = vunpack.c.h.s8.bf16 %v375
    %v620 = vunpack.c.h.s8.bf16 %v376
    %v621 = vunpack.c.h.s8.bf16 %v377
    %v622 = vunpack.c.h.s8.bf16 %v378
    %v623 = vunpack.c.l.s8.bf16 %v379
    %v624 = vunpack.c.l.s8.bf16 %v380
    %v625 = vunpack.c.l.s8.bf16 %v381
    %v626 = vunpack.c.l.s8.bf16 %v382
    %v627 = vunpack.c.h.s8.bf16 %v379
    %v628 = vunpack.c.h.s8.bf16 %v380
    %v629 = vunpack.c.h.s8.bf16 %v381
    %v630 = vunpack.c.h.s8.bf16 %v382
    %v631 = vunpack.c.l.s8.bf16 %v383
    %v632 = vunpack.c.l.s8.bf16 %v384
    %v633 = vunpack.c.l.s8.bf16 %v385
    %v634 = vunpack.c.l.s8.bf16 %v386
    %v635 = vunpack.c.h.s8.bf16 %v383
    %v636 = vunpack.c.h.s8.bf16 %v384
    %v637 = vunpack.c.h.s8.bf16 %v385
    %v638 = vunpack.c.h.s8.bf16 %v386
    %v639 = vunpack.c.l.s8.bf16 %v387
    %v640 = vunpack.c.l.s8.bf16 %v388
    %v641 = vunpack.c.l.s8.bf16 %v389
    %v642 = vunpack.c.l.s8.bf16 %v390
    %v643 = vunpack.c.h.s8.bf16 %v387
    %v644 = vunpack.c.h.s8.bf16 %v388
    %v645 = vunpack.c.h.s8.bf16 %v389
    %v646 = vunpack.c.h.s8.bf16 %v390
    %v648 = vcombine.high %v262, %v262
    %v650 = vunpack.c.l.s4 1966171168
    %v651 = vunpack.c.0.s8 %v650
    %v652 = vlaneseq
    %v653 = vshrl.u32 %v652, 7
    %v654 = vsub.s32 %v651, %v653
    %v655 = vrot.slane %v262, %v654
    %v657 = vunpack.c.l.s4 1966171168
    %v658 = vunpack.c.0.s8 %v657
    %v659 = vlaneseq
    %v660 = vshrl.u32 %v659, 7
    %v661 = vsub.s32 %v658, %v660
    %v662 = vrot.slane %v648, %v661
    %v663 = vcombine.high %v655, %v655
    %v664 = vcombine.high %v662, %v662
    %v666 = vunpack.c.l.s4 1966171168
    %v667 = vunpack.c.0.s8 %v666
    %v668 = vlaneseq
    %v669 = vshrl.u32 %v668, 7
    %v670 = vsub.s32 %v667, %v669
    %v671 = vrot.slane %v655, %v670
    %v673 = vunpack.c.l.s4 1966171168
    %v674 = vunpack.c.0.s8 %v673
    %v675 = vlaneseq
    %v676 = vshrl.u32 %v675, 7
    %v677 = vsub.s32 %v674, %v676
    %v678 = vrot.slane %v662, %v677
    %v680 = vunpack.c.l.s4 1966171168
    %v681 = vunpack.c.0.s8 %v680
    %v682 = vlaneseq
    %v683 = vshrl.u32 %v682, 7
    %v684 = vsub.s32 %v681, %v683
    %v685 = vrot.slane %v663, %v684
    %v687 = vunpack.c.l.s4 1966171168
    %v688 = vunpack.c.0.s8 %v687
    %v689 = vlaneseq
    %v690 = vshrl.u32 %v689, 7
    %v691 = vsub.s32 %v688, %v690
    %v692 = vrot.slane %v664, %v691
    %v693 = vcombine.high %v671, %v671
    %v694 = vcombine.high %v678, %v678
    %v695 = vcombine.high %v685, %v685
    %v696 = vcombine.high %v692, %v692
    %705 = vmatprep.subr.bf16.mxu0 %v420
    %706 = vmatpush1.bf16.msra.mxu0 %v419
    %707 = vmatprep.subr.bf16.mxu0 %v416
    %708 = vmatpush1.bf16.msra.mxu0 %v415
    %709 = vmatprep.subr.bf16.mxu0 %v412
    %710 = vmatpush1.bf16.msra.mxu0 %v411
    %711 = vmatprep.subr.bf16.mxu0 %v408
    %712 = vmatpush1.bf16.msra.mxu0 %v407
    %713 = vmatprep.subr.bf16.mxu0 %v404
    %714 = vmatpush1.bf16.msra.mxu0 %v403
    %715 = vmatprep.subr.bf16.mxu0 %v400
    %716 = vmatpush1.bf16.msra.mxu0 %v399
    %717 = vmatprep.subr.bf16.mxu0 %v396
    %718 = vmatpush1.bf16.msra.mxu0 %v395
    %719 = vmatprep.subr.bf16.mxu0 %v392
    %720 = vmatpush1.bf16.msra.mxu0 %v391
    %721 = vmatprep.subr.bf16.mxu0 %v452
    %722 = vmatpush2.bf16.msra.mxu0 %v451
    %723 = vmatprep.subr.bf16.mxu0 %v448
    %724 = vmatpush2.bf16.msra.mxu0 %v447
    %725 = vmatprep.subr.bf16.mxu0 %v444
    %726 = vmatpush2.bf16.msra.mxu0 %v443
    %727 = vmatprep.subr.bf16.mxu0 %v440
    %728 = vmatpush2.bf16.msra.mxu0 %v439
    %729 = vmatprep.subr.bf16.mxu0 %v436
    %730 = vmatpush2.bf16.msra.mxu0 %v435
    %731 = vmatprep.subr.bf16.mxu0 %v432
    %732 = vmatpush2.bf16.msra.mxu0 %v431
    %733 = vmatprep.subr.bf16.mxu0 %v428
    %734 = vmatpush2.bf16.msra.mxu0 %v427
    %735 = vmatprep.subr.bf16.mxu0 %v424
    %736 = vmatpush2.bf16.msra.mxu0 %v423
    %737 = vmatprep.mubr.bf16.mxu0 %v685
    %738 = vmatmul.mubr.bf16.gmra.mxu0 %v671
    %v739 = vpop.f32.mrf.mxu0
    %v740 = vadd.f32 0.0, %v739
    %v741 = vpop.f32.mrf.mxu0
    %v742 = vadd.f32 0.0, %v741
    %v743 = vpop.f32.mrf.mxu0
    %v744 = vpop.f32.mrf.mxu0
    %745 = vdwg.mxu0
    %746 = vmatprep.subr.bf16.mxu0 %v484
    %747 = vmatpush1.bf16.msra.mxu0 %v483
    %748 = vmatprep.subr.bf16.mxu0 %v480
    %749 = vmatpush1.bf16.msra.mxu0 %v479
    %750 = vmatprep.subr.bf16.mxu0 %v476
    %751 = vmatpush1.bf16.msra.mxu0 %v475
    %752 = vmatprep.subr.bf16.mxu0 %v472
    %753 = vmatpush1.bf16.msra.mxu0 %v471
    %754 = vmatprep.subr.bf16.mxu0 %v468
    %755 = vmatpush1.bf16.msra.mxu0 %v467
    %756 = vmatprep.subr.bf16.mxu0 %v464
    %757 = vmatpush1.bf16.msra.mxu0 %v463
    %758 = vmatprep.subr.bf16.mxu0 %v460
    %759 = vmatpush1.bf16.msra.mxu0 %v459
    %760 = vmatprep.subr.bf16.mxu0 %v456
    %761 = vmatpush1.bf16.msra.mxu0 %v455
    %762 = vmatprep.subr.bf16.mxu0 %v516
    %763 = vmatpush2.bf16.msra.mxu0 %v515
    %764 = vmatprep.subr.bf16.mxu0 %v512
    %765 = vmatpush2.bf16.msra.mxu0 %v511
    %766 = vmatprep.subr.bf16.mxu0 %v508
    %767 = vmatpush2.bf16.msra.mxu0 %v507
    %768 = vmatprep.subr.bf16.mxu0 %v504
    %769 = vmatpush2.bf16.msra.mxu0 %v503
    %770 = vmatprep.subr.bf16.mxu0 %v500
    %771 = vmatpush2.bf16.msra.mxu0 %v499
    %772 = vmatprep.subr.bf16.mxu0 %v496
    %773 = vmatpush2.bf16.msra.mxu0 %v495
    %774 = vmatprep.subr.bf16.mxu0 %v492
    %775 = vmatpush2.bf16.msra.mxu0 %v491
    %776 = vmatprep.subr.bf16.mxu0 %v488
    %777 = vmatpush2.bf16.msra.mxu0 %v487
    %778 = vmatprep.mubr.bf16.mxu0 %v695
    %779 = vmatmul.mubr.bf16.gmra.mxu0 %v693
    %v780 = vpop.f32.mrf.mxu0
    %v781 = vadd.f32 %v740, %v780
    %v782 = vpop.f32.mrf.mxu0
    %v783 = vadd.f32 %v742, %v782
    %v784 = vpop.f32.mrf.mxu0
    %v785 = vpop.f32.mrf.mxu0
    %786 = vdwg.mxu0
    %787 = vmatprep.subr.bf16.mxu0 %v548
    %788 = vmatpush1.bf16.msra.mxu0 %v547
    %789 = vmatprep.subr.bf16.mxu0 %v544
    %790 = vmatpush1.bf16.msra.mxu0 %v543
    %791 = vmatprep.subr.bf16.mxu0 %v540
    %792 = vmatpush1.bf16.msra.mxu0 %v539
    %793 = vmatprep.subr.bf16.mxu0 %v536
    %794 = vmatpush1.bf16.msra.mxu0 %v535
    %795 = vmatprep.subr.bf16.mxu0 %v532
    %796 = vmatpush1.bf16.msra.mxu0 %v531
    %797 = vmatprep.subr.bf16.mxu0 %v528
    %798 = vmatpush1.bf16.msra.mxu0 %v527
    %799 = vmatprep.subr.bf16.mxu0 %v524
    %800 = vmatpush1.bf16.msra.mxu0 %v523
    %801 = vmatprep.subr.bf16.mxu0 %v520
    %802 = vmatpush1.bf16.msra.mxu0 %v519
    %803 = vmatprep.subr.bf16.mxu0 %v580
    %804 = vmatpush2.bf16.msra.mxu0 %v579
    %805 = vmatprep.subr.bf16.mxu0 %v576
    %806 = vmatpush2.bf16.msra.mxu0 %v575
    %807 = vmatprep.subr.bf16.mxu0 %v572
    %808 = vmatpush2.bf16.msra.mxu0 %v571
    %809 = vmatprep.subr.bf16.mxu0 %v568
    %810 = vmatpush2.bf16.msra.mxu0 %v567
    %811 = vmatprep.subr.bf16.mxu0 %v564
    %812 = vmatpush2.bf16.msra.mxu0 %v563
    %813 = vmatprep.subr.bf16.mxu0 %v560
    %814 = vmatpush2.bf16.msra.mxu0 %v559
    %815 = vmatprep.subr.bf16.mxu0 %v556
    %816 = vmatpush2.bf16.msra.mxu0 %v555
    %817 = vmatprep.subr.bf16.mxu0 %v552
    %818 = vmatpush2.bf16.msra.mxu0 %v551
    %819 = vmatprep.mubr.bf16.mxu0 %v692
    %820 = vmatmul.mubr.bf16.gmra.mxu0 %v678
    %v821 = vpop.f32.mrf.mxu0
    %v822 = vadd.f32 %v781, %v821
    %v823 = vpop.f32.mrf.mxu0
    %v824 = vadd.f32 %v783, %v823
    %v825 = vpop.f32.mrf.mxu0
    %v826 = vpop.f32.mrf.mxu0
    %827 = vdwg.mxu0
    %828 = vmatprep.subr.bf16.mxu0 %v612
    %829 = vmatpush1.bf16.msra.mxu0 %v611
    %830 = vmatprep.subr.bf16.mxu0 %v608
    %831 = vmatpush1.bf16.msra.mxu0 %v607
    %832 = vmatprep.subr.bf16.mxu0 %v604
    %833 = vmatpush1.bf16.msra.mxu0 %v603
    %834 = vmatprep.subr.bf16.mxu0 %v600
    %835 = vmatpush1.bf16.msra.mxu0 %v599
    %836 = vmatprep.subr.bf16.mxu0 %v596
    %837 = vmatpush1.bf16.msra.mxu0 %v595
    %838 = vmatprep.subr.bf16.mxu0 %v592
    %839 = vmatpush1.bf16.msra.mxu0 %v591
    %840 = vmatprep.subr.bf16.mxu0 %v588
    %841 = vmatpush1.bf16.msra.mxu0 %v587
    %842 = vmatprep.subr.bf16.mxu0 %v584
    %843 = vmatpush1.bf16.msra.mxu0 %v583
    %844 = vmatprep.subr.bf16.mxu0 %v644
    %845 = vmatpush2.bf16.msra.mxu0 %v643
    %846 = vmatprep.subr.bf16.mxu0 %v640
    %847 = vmatpush2.bf16.msra.mxu0 %v639
    %848 = vmatprep.subr.bf16.mxu0 %v636
    %849 = vmatpush2.bf16.msra.mxu0 %v635
    %850 = vmatprep.subr.bf16.mxu0 %v632
    %851 = vmatpush2.bf16.msra.mxu0 %v631
    %852 = vmatprep.subr.bf16.mxu0 %v628
    %853 = vmatpush2.bf16.msra.mxu0 %v627
    %854 = vmatprep.subr.bf16.mxu0 %v624
    %855 = vmatpush2.bf16.msra.mxu0 %v623
    %856 = vmatprep.subr.bf16.mxu0 %v620
    %857 = vmatpush2.bf16.msra.mxu0 %v619
    %858 = vmatprep.subr.bf16.mxu0 %v616
    %859 = vmatpush2.bf16.msra.mxu0 %v615
    %860 = vmatprep.mubr.bf16.mxu0 %v696
    %861 = vmatmul.mubr.bf16.gmra.mxu0 %v694
    %v862 = vpop.f32.mrf.mxu0
    %v863 = vadd.f32 %v822, %v862
    %v864 = vpop.f32.mrf.mxu0
    %v865 = vadd.f32 %v824, %v864
    %v866 = vpop.f32.mrf.mxu0
    %v867 = vpop.f32.mrf.mxu0
    %868 = vdwg.mxu0
    %869 = vmatprep.subr.bf16.mxu0 %v422
    %870 = vmatpush1.bf16.msra.mxu0 %v421
    %871 = vmatprep.subr.bf16.mxu0 %v418
    %872 = vmatpush1.bf16.msra.mxu0 %v417
    %873 = vmatprep.subr.bf16.mxu0 %v414
    %874 = vmatpush1.bf16.msra.mxu0 %v413
    %875 = vmatprep.subr.bf16.mxu0 %v410
    %876 = vmatpush1.bf16.msra.mxu0 %v409
    %877 = vmatprep.subr.bf16.mxu0 %v406
    %878 = vmatpush1.bf16.msra.mxu0 %v405
    %879 = vmatprep.subr.bf16.mxu0 %v402
    %880 = vmatpush1.bf16.msra.mxu0 %v401
    %881 = vmatprep.subr.bf16.mxu0 %v398
    %882 = vmatpush1.bf16.msra.mxu0 %v397
    %883 = vmatprep.subr.bf16.mxu0 %v394
    %884 = vmatpush1.bf16.msra.mxu0 %v393
    %885 = vmatprep.subr.bf16.mxu0 %v454
    %886 = vmatpush2.bf16.msra.mxu0 %v453
    %887 = vmatprep.subr.bf16.mxu0 %v450
    %888 = vmatpush2.bf16.msra.mxu0 %v449
    %889 = vmatprep.subr.bf16.mxu0 %v446
    %890 = vmatpush2.bf16.msra.mxu0 %v445
    %891 = vmatprep.subr.bf16.mxu0 %v442
    %892 = vmatpush2.bf16.msra.mxu0 %v441
    %893 = vmatprep.subr.bf16.mxu0 %v438
    %894 = vmatpush2.bf16.msra.mxu0 %v437
    %895 = vmatprep.subr.bf16.mxu0 %v434
    %896 = vmatpush2.bf16.msra.mxu0 %v433
    %897 = vmatprep.subr.bf16.mxu0 %v430
    %898 = vmatpush2.bf16.msra.mxu0 %v429
    %899 = vmatprep.subr.bf16.mxu0 %v426
    %900 = vmatpush2.bf16.msra.mxu0 %v425
    %901 = vmatprep.mubr.bf16.mxu0 %v685
    %902 = vmatmul.mubr.bf16.gmra.mxu0 %v671
    %v903 = vpop.f32.mrf.mxu0
    %v904 = vadd.f32 0.0, %v903
    %v905 = vpop.f32.mrf.mxu0
    %v906 = vadd.f32 0.0, %v905
    %v907 = vpop.f32.mrf.mxu0
    %v908 = vpop.f32.mrf.mxu0
    %909 = vdwg.mxu0
    %910 = vmatprep.subr.bf16.mxu0 %v486
    %911 = vmatpush1.bf16.msra.mxu0 %v485
    %912 = vmatprep.subr.bf16.mxu0 %v482
    %913 = vmatpush1.bf16.msra.mxu0 %v481
    %914 = vmatprep.subr.bf16.mxu0 %v478
    %915 = vmatpush1.bf16.msra.mxu0 %v477
    %916 = vmatprep.subr.bf16.mxu0 %v474
    %917 = vmatpush1.bf16.msra.mxu0 %v473
    %918 = vmatprep.subr.bf16.mxu0 %v470
    %919 = vmatpush1.bf16.msra.mxu0 %v469
    %920 = vmatprep.subr.bf16.mxu0 %v466
    %921 = vmatpush1.bf16.msra.mxu0 %v465
    %922 = vmatprep.subr.bf16.mxu0 %v462
    %923 = vmatpush1.bf16.msra.mxu0 %v461
    %924 = vmatprep.subr.bf16.mxu0 %v458
    %925 = vmatpush1.bf16.msra.mxu0 %v457
    %926 = vmatprep.subr.bf16.mxu0 %v518
    %927 = vmatpush2.bf16.msra.mxu0 %v517
    %928 = vmatprep.subr.bf16.mxu0 %v514
    %929 = vmatpush2.bf16.msra.mxu0 %v513
    %930 = vmatprep.subr.bf16.mxu0 %v510
    %931 = vmatpush2.bf16.msra.mxu0 %v509
    %932 = vmatprep.subr.bf16.mxu0 %v506
    %933 = vmatpush2.bf16.msra.mxu0 %v505
    %934 = vmatprep.subr.bf16.mxu0 %v502
    %935 = vmatpush2.bf16.msra.mxu0 %v501
    %936 = vmatprep.subr.bf16.mxu0 %v498
    %937 = vmatpush2.bf16.msra.mxu0 %v497
    %938 = vmatprep.subr.bf16.mxu0 %v494
    %939 = vmatpush2.bf16.msra.mxu0 %v493
    %940 = vmatprep.subr.bf16.mxu0 %v490
    %941 = vmatpush2.bf16.msra.mxu0 %v489
    %942 = vmatprep.mubr.bf16.mxu0 %v695
    %943 = vmatmul.mubr.bf16.gmra.mxu0 %v693
    %v944 = vpop.f32.mrf.mxu0
    %v945 = vadd.f32 %v904, %v944
    %v946 = vpop.f32.mrf.mxu0
    %v947 = vadd.f32 %v906, %v946
    %v948 = vpop.f32.mrf.mxu0
    %v949 = vpop.f32.mrf.mxu0
    %950 = vdwg.mxu0
    %951 = vmatprep.subr.bf16.mxu0 %v550
    %952 = vmatpush1.bf16.msra.mxu0 %v549
    %953 = vmatprep.subr.bf16.mxu0 %v546
    %954 = vmatpush1.bf16.msra.mxu0 %v545
    %955 = vmatprep.subr.bf16.mxu0 %v542
    %956 = vmatpush1.bf16.msra.mxu0 %v541
    %957 = vmatprep.subr.bf16.mxu0 %v538
    %958 = vmatpush1.bf16.msra.mxu0 %v537
    %959 = vmatprep.subr.bf16.mxu0 %v534
    %960 = vmatpush1.bf16.msra.mxu0 %v533
    %961 = vmatprep.subr.bf16.mxu0 %v530
    %962 = vmatpush1.bf16.msra.mxu0 %v529
    %963 = vmatprep.subr.bf16.mxu0 %v526
    %964 = vmatpush1.bf16.msra.mxu0 %v525
    %965 = vmatprep.subr.bf16.mxu0 %v522
    %966 = vmatpush1.bf16.msra.mxu0 %v521
    %967 = vmatprep.subr.bf16.mxu0 %v582
    %968 = vmatpush2.bf16.msra.mxu0 %v581
    %969 = vmatprep.subr.bf16.mxu0 %v578
    %970 = vmatpush2.bf16.msra.mxu0 %v577
    %971 = vmatprep.subr.bf16.mxu0 %v574
    %972 = vmatpush2.bf16.msra.mxu0 %v573
    %973 = vmatprep.subr.bf16.mxu0 %v570
    %974 = vmatpush2.bf16.msra.mxu0 %v569
    %975 = vmatprep.subr.bf16.mxu0 %v566
    %976 = vmatpush2.bf16.msra.mxu0 %v565
    %977 = vmatprep.subr.bf16.mxu0 %v562
    %978 = vmatpush2.bf16.msra.mxu0 %v561
    %979 = vmatprep.subr.bf16.mxu0 %v558
    %980 = vmatpush2.bf16.msra.mxu0 %v557
    %981 = vmatprep.subr.bf16.mxu0 %v554
    %982 = vmatpush2.bf16.msra.mxu0 %v553
    %983 = vmatprep.mubr.bf16.mxu0 %v692
    %984 = vmatmul.mubr.bf16.gmra.mxu0 %v678
    %v985 = vpop.f32.mrf.mxu0
    %v986 = vadd.f32 %v945, %v985
    %v987 = vpop.f32.mrf.mxu0
    %v988 = vadd.f32 %v947, %v987
    %v989 = vpop.f32.mrf.mxu0
    %v990 = vpop.f32.mrf.mxu0
    %991 = vdwg.mxu0
    %992 = vmatprep.subr.bf16.mxu0 %v614
    %993 = vmatpush1.bf16.msra.mxu0 %v613
    %994 = vmatprep.subr.bf16.mxu0 %v610
    %995 = vmatpush1.bf16.msra.mxu0 %v609
    %996 = vmatprep.subr.bf16.mxu0 %v606
    %997 = vmatpush1.bf16.msra.mxu0 %v605
    %998 = vmatprep.subr.bf16.mxu0 %v602
    %999 = vmatpush1.bf16.msra.mxu0 %v601
    %1000 = vmatprep.subr.bf16.mxu0 %v598
    %1001 = vmatpush1.bf16.msra.mxu0 %v597
    %1002 = vmatprep.subr.bf16.mxu0 %v594
    %1003 = vmatpush1.bf16.msra.mxu0 %v593
    %1004 = vmatprep.subr.bf16.mxu0 %v590
    %1005 = vmatpush1.bf16.msra.mxu0 %v589
    %1006 = vmatprep.subr.bf16.mxu0 %v586
    %1007 = vmatpush1.bf16.msra.mxu0 %v585
    %1008 = vmatprep.subr.bf16.mxu0 %v646
    %1009 = vmatpush2.bf16.msra.mxu0 %v645
    %1010 = vmatprep.subr.bf16.mxu0 %v642
    %1011 = vmatpush2.bf16.msra.mxu0 %v641
    %1012 = vmatprep.subr.bf16.mxu0 %v638
    %1013 = vmatpush2.bf16.msra.mxu0 %v637
    %1014 = vmatprep.subr.bf16.mxu0 %v634
    %1015 = vmatpush2.bf16.msra.mxu0 %v633
    %1016 = vmatprep.subr.bf16.mxu0 %v630
    %1017 = vmatpush2.bf16.msra.mxu0 %v629
    %1018 = vmatprep.subr.bf16.mxu0 %v626
    %1019 = vmatpush2.bf16.msra.mxu0 %v625
    %1020 = vmatprep.subr.bf16.mxu0 %v622
    %1021 = vmatpush2.bf16.msra.mxu0 %v621
    %1022 = vmatprep.subr.bf16.mxu0 %v618
    %1023 = vmatpush2.bf16.msra.mxu0 %v617
    %1024 = vmatprep.mubr.bf16.mxu0 %v696
    %1025 = vmatmul.mubr.bf16.gmra.mxu0 %v694
    %v1026 = vpop.f32.mrf.mxu0
    %v1027 = vadd.f32 %v986, %v1026
    %v1028 = vpop.f32.mrf.mxu0
    %v1029 = vadd.f32 %v988, %v1028
    %v1030 = vpop.f32.mrf.mxu0
    %v1031 = vpop.f32.mrf.mxu0
    %1032 = vdwg.mxu0
    %v1033 = vld [vmem:[%s3] sm:$0xf]
    %v1035 = vlaneseq
    %v1036 = vshrl.u32 %v1035, 7
    %v1037 = vsub.s32 0, %v1036
    %v1038 = vrot.slane %v1033, %v1037
    %v1039 = vlaneseq
    %v1040 = vshrl.u32 %v1039, 7
    %v1041 = vsub.s32 1, %v1040
    %v1042 = vrot.slane %v1033, %v1041
    %v1043 = vlaneseq
    %v1044 = vshrl.u32 %v1043, 7
    %v1045 = vsub.s32 2, %v1044
    %v1046 = vrot.slane %v1033, %v1045
    %v1047 = vlaneseq
    %v1048 = vshrl.u32 %v1047, 7
    %v1049 = vsub.s32 3, %v1048
    %v1050 = vrot.slane %v1033, %v1049
    %v1055 = vmul.f32 %v863, %v1038
    %v1056 = vmul.f32 %v865, %v1042
    %v1057 = vmul.f32 %v1027, %v1046
    %v1058 = vmul.f32 %v1029, %v1050
    %v1059 = vld [vmem:[#allocation9] sm:$0xf]
    %v1061 = vlaneseq
    %v1062 = vshrl.u32 %v1061, 7
    %v1063 = vsub.s32 0, %v1062
    %v1064 = vrot.slane %v1059, %v1063
    %v1065 = vlaneseq
    %v1066 = vshrl.u32 %v1065, 7
    %v1067 = vsub.s32 1, %v1066
    %v1068 = vrot.slane %v1059, %v1067
    %v1069 = vlaneseq
    %v1070 = vshrl.u32 %v1069, 7
    %v1071 = vsub.s32 2, %v1070
    %v1072 = vrot.slane %v1059, %v1071
    %v1073 = vlaneseq
    %v1074 = vshrl.u32 %v1073, 7
    %v1075 = vsub.s32 3, %v1074
    %v1076 = vrot.slane %v1059, %v1075
    %v1081 = vadd.f32 %v1055, %v1064
    %v1082 = vadd.f32 %v1056, %v1068
    %v1083 = vadd.f32 %v1057, %v1072
    %v1084 = vadd.f32 %v1058, %v1076
    %vm1085 = vcmask 1041408
    %v1086 = vsel %vm1085, %v1081, 0.0
    %v1087 = vrot.slane %v1086, 4
    %v1088 = vadd.f32 %v1086, %v1087
    %v1089 = vrot.slane %v1088, 2
    %v1090 = vadd.f32 %v1088, %v1089
    %v1091 = vrot.slane %v1090, 1
    %v1092 = vadd.f32 %v1090, %v1091
    %v1093 = vsel %vm1085, %v1082, 0.0
    %v1094 = vrot.slane %v1093, 4
    %v1095 = vadd.f32 %v1093, %v1094
    %v1096 = vrot.slane %v1095, 2
    %v1097 = vadd.f32 %v1095, %v1096
    %v1098 = vrot.slane %v1097, 1
    %v1099 = vadd.f32 %v1097, %v1098
    %v1100 = vsel %vm1085, %v1083, 0.0
    %v1101 = vrot.slane %v1100, 4
    %v1102 = vadd.f32 %v1100, %v1101
    %v1103 = vrot.slane %v1102, 2
    %v1104 = vadd.f32 %v1102, %v1103
    %v1105 = vrot.slane %v1104, 1
    %v1106 = vadd.f32 %v1104, %v1105
    %v1107 = vsel %vm1085, %v1084, 0.0
    %v1108 = vrot.slane %v1107, 4
    %v1109 = vadd.f32 %v1107, %v1108
    %v1110 = vrot.slane %v1109, 2
    %v1111 = vadd.f32 %v1109, %v1110
    %v1112 = vrot.slane %v1111, 1
    %v1113 = vadd.f32 %v1111, %v1112
    %v1114 = vrcp.pop 2.0
    %v1115 = vmul.f32 %v1092, %v1114
    %v1116 = vmul.f32 %v1099, %v1114
    %v1117 = vmul.f32 %v1106, %v1114
    %v1118 = vmul.f32 %v1113, %v1114
    %v1119 = vsub.f32 %v1081, %v1115
    %v1120 = vsub.f32 %v1082, %v1116
    %v1121 = vsub.f32 %v1083, %v1117
    %v1122 = vsub.f32 %v1084, %v1118
    %v1123 = vmul.f32 %v1119, %v1119
    %v1124 = vmul.f32 %v1120, %v1120
    %v1125 = vmul.f32 %v1121, %v1121
    %v1126 = vmul.f32 %v1122, %v1122
    %v1127 = vsel %vm1085, %v1123, 0.0
    %v1128 = vrot.slane %v1127, 4
    %v1129 = vadd.f32 %v1127, %v1128
    %v1130 = vrot.slane %v1129, 2
    %v1131 = vadd.f32 %v1129, %v1130
    %v1132 = vrot.slane %v1131, 1
    %v1133 = vadd.f32 %v1131, %v1132
    %v1134 = vsel %vm1085, %v1124, 0.0
    %v1135 = vrot.slane %v1134, 4
    %v1136 = vadd.f32 %v1134, %v1135
    %v1137 = vrot.slane %v1136, 2
    %v1138 = vadd.f32 %v1136, %v1137
    %v1139 = vrot.slane %v1138, 1
    %v1140 = vadd.f32 %v1138, %v1139
    %v1141 = vsel %vm1085, %v1125, 0.0
    %v1142 = vrot.slane %v1141, 4
    %v1143 = vadd.f32 %v1141, %v1142
    %v1144 = vrot.slane %v1143, 2
    %v1145 = vadd.f32 %v1143, %v1144
    %v1146 = vrot.slane %v1145, 1
    %v1147 = vadd.f32 %v1145, %v1146
    %v1148 = vsel %vm1085, %v1126, 0.0
    %v1149 = vrot.slane %v1148, 4
    %v1150 = vadd.f32 %v1148, %v1149
    %v1151 = vrot.slane %v1150, 2
    %v1152 = vadd.f32 %v1150, %v1151
    %v1153 = vrot.slane %v1152, 1
    %v1154 = vadd.f32 %v1152, %v1153
    %v1155 = vmul.f32 %v1133, %v1114
    %v1156 = vmul.f32 %v1140, %v1114
    %v1157 = vmul.f32 %v1147, %v1114
    %v1158 = vmul.f32 %v1154, %v1114
    %v1159 = vadd.f32 %v1155, 1e-05
    %v1160 = vadd.f32 %v1156, 1e-05
    %v1161 = vadd.f32 %v1157, 1e-05
    %v1162 = vadd.f32 %v1158, 1e-05
    %v1163 = vrsqrt.pop %v1159
    %v1164 = vrsqrt.pop %v1160
    %v1165 = vrsqrt.pop %v1161
    %v1166 = vrsqrt.pop %v1162
    %v1167 = vmul.f32 %v1119, %v1163
    %v1168 = vmul.f32 %v1120, %v1164
    %v1169 = vmul.f32 %v1121, %v1165
    %v1170 = vmul.f32 %v1122, %v1166
    %v1171 = vpack.c.bf16 %v1167, %v1167
    %v1172 = vpack.c.bf16 %v1168, %v1168
    %v1173 = vpack.c.bf16 %v1169, %v1169
    %v1174 = vpack.c.bf16 %v1170, %v1170
    %v1175 = vld [vmem:[#allocation11] sm:$0xff]
    %v1176 = vld [vmem:[#allocation11 + $0x8] sm:$0xff]
    %v1177 = vld [vmem:[#allocation11 + $0x10] sm:$0xff]
    %v1178 = vld [vmem:[#allocation11 + $0x18] sm:$0xff]
    %v1179 = vld [vmem:[#allocation11 + $0x20] sm:$0xff]
    %v1180 = vld [vmem:[#allocation11 + $0x28] sm:$0xff]
    %v1181 = vld [vmem:[#allocation11 + $0x30] sm:$0xff]
    %v1182 = vld [vmem:[#allocation11 + $0x38] sm:$0xff]
    %v1183 = vld [vmem:[#allocation11 + $0x40] sm:$0xff]
    %v1184 = vld [vmem:[#allocation11 + $0x48] sm:$0xff]
    %v1185 = vld [vmem:[#allocation11 + $0x50] sm:$0xff]
    %v1186 = vld [vmem:[#allocation11 + $0x58] sm:$0xff]
    %v1187 = vld [vmem:[#allocation11 + $0x60] sm:$0xff]
    %v1188 = vld [vmem:[#allocation11 + $0x68] sm:$0xff]
    %v1189 = vld [vmem:[#allocation11 + $0x70] sm:$0xff]
    %v1190 = vld [vmem:[#allocation11 + $0x78] sm:$0xff]
    %v1191 = vld [vmem:[#allocation11 + $0x80] sm:$0xff]
    %v1192 = vld [vmem:[#allocation11 + $0x88] sm:$0xff]
    %v1193 = vld [vmem:[#allocation11 + $0x90] sm:$0xff]
    %v1194 = vld [vmem:[#allocation11 + $0x98] sm:$0xff]
    %v1195 = vld [vmem:[#allocation11 + $0xa0] sm:$0xff]
    %v1196 = vld [vmem:[#allocation11 + $0xa8] sm:$0xff]
    %v1197 = vld [vmem:[#allocation11 + $0xb0] sm:$0xff]
    %v1198 = vld [vmem:[#allocation11 + $0xb8] sm:$0xff]
    %v1199 = vld [vmem:[#allocation11 + $0xc0] sm:$0xff]
    %v1200 = vld [vmem:[#allocation11 + $0xc8] sm:$0xff]
    %v1201 = vld [vmem:[#allocation11 + $0xd0] sm:$0xff]
    %v1202 = vld [vmem:[#allocation11 + $0xd8] sm:$0xff]
    %v1203 = vld [vmem:[#allocation11 + $0xe0] sm:$0xff]
    %v1204 = vld [vmem:[#allocation11 + $0xe8] sm:$0xff]
    %v1205 = vld [vmem:[#allocation11 + $0xf0] sm:$0xff]
    %v1206 = vld [vmem:[#allocation11 + $0xf8] sm:$0xff]
    %v1207 = vld [vmem:[#allocation11 + $0x100] sm:$0xff]
    %v1208 = vld [vmem:[#allocation11 + $0x108] sm:$0xff]
    %v1209 = vld [vmem:[#allocation11 + $0x110] sm:$0xff]
    %v1210 = vld [vmem:[#allocation11 + $0x118] sm:$0xff]
    %v1211 = vld [vmem:[#allocation11 + $0x120] sm:$0xff]
    %v1212 = vld [vmem:[#allocation11 + $0x128] sm:$0xff]
    %v1213 = vld [vmem:[#allocation11 + $0x130] sm:$0xff]
    %v1214 = vld [vmem:[#allocation11 + $0x138] sm:$0xff]
    %v1215 = vld [vmem:[#allocation11 + $0x140] sm:$0xff]
    %v1216 = vld [vmem:[#allocation11 + $0x148] sm:$0xff]
    %v1217 = vld [vmem:[#allocation11 + $0x150] sm:$0xff]
    %v1218 = vld [vmem:[#allocation11 + $0x158] sm:$0xff]
    %v1219 = vld [vmem:[#allocation11 + $0x160] sm:$0xff]
    %v1220 = vld [vmem:[#allocation11 + $0x168] sm:$0xff]
    %v1221 = vld [vmem:[#allocation11 + $0x170] sm:$0xff]
    %v1222 = vld [vmem:[#allocation11 + $0x178] sm:$0xff]
    %v1223 = vld [vmem:[#allocation11 + $0x180] sm:$0xff]
    %v1224 = vld [vmem:[#allocation11 + $0x188] sm:$0xff]
    %v1225 = vld [vmem:[#allocation11 + $0x190] sm:$0xff]
    %v1226 = vld [vmem:[#allocation11 + $0x198] sm:$0xff]
    %v1227 = vld [vmem:[#allocation11 + $0x1a0] sm:$0xff]
    %v1228 = vld [vmem:[#allocation11 + $0x1a8] sm:$0xff]
    %v1229 = vld [vmem:[#allocation11 + $0x1b0] sm:$0xff]
    %v1230 = vld [vmem:[#allocation11 + $0x1b8] sm:$0xff]
    %v1231 = vld [vmem:[#allocation11 + $0x1c0] sm:$0xff]
    %v1232 = vld [vmem:[#allocation11 + $0x1c8] sm:$0xff]
    %v1233 = vld [vmem:[#allocation11 + $0x1d0] sm:$0xff]
    %v1234 = vld [vmem:[#allocation11 + $0x1d8] sm:$0xff]
    %v1235 = vld [vmem:[#allocation11 + $0x1e0] sm:$0xff]
    %v1236 = vld [vmem:[#allocation11 + $0x1e8] sm:$0xff]
    %v1237 = vld [vmem:[#allocation11 + $0x1f0] sm:$0xff]
    %v1238 = vld [vmem:[#allocation11 + $0x1f8] sm:$0xff]
    %v1239 = vld [vmem:[%s6] sm:$0x3]
    %v1241 = vlaneseq
    %v1242 = vshrl.u32 %v1241, 7
    %v1243 = vsub.s32 0, %v1242
    %v1244 = vrot.slane %v1239, %v1243
    %v1245 = vlaneseq
    %v1246 = vshrl.u32 %v1245, 7
    %v1247 = vsub.s32 1, %v1246
    %v1248 = vrot.slane %v1239, %v1247
    %v1315 = vunpack.c.l.b16 %v1175
    %v1316 = vunpack.c.h.b16 %v1175
    %v1317 = vunpack.c.l.b16 %v1176
    %v1318 = vunpack.c.h.b16 %v1176
    %v1319 = vunpack.c.l.b16 %v1177
    %v1320 = vunpack.c.h.b16 %v1177
    %v1321 = vunpack.c.l.b16 %v1178
    %v1322 = vunpack.c.h.b16 %v1178
    %v1323 = vunpack.c.l.b16 %v1179
    %v1324 = vunpack.c.h.b16 %v1179
    %v1325 = vunpack.c.l.b16 %v1180
    %v1326 = vunpack.c.h.b16 %v1180
    %v1327 = vunpack.c.l.b16 %v1181
    %v1328 = vunpack.c.h.b16 %v1181
    %v1329 = vunpack.c.l.b16 %v1182
    %v1330 = vunpack.c.h.b16 %v1182
    %v1331 = vunpack.c.l.b16 %v1183
    %v1332 = vunpack.c.h.b16 %v1183
    %v1333 = vunpack.c.l.b16 %v1184
    %v1334 = vunpack.c.h.b16 %v1184
    %v1335 = vunpack.c.l.b16 %v1185
    %v1336 = vunpack.c.h.b16 %v1185
    %v1337 = vunpack.c.l.b16 %v1186
    %v1338 = vunpack.c.h.b16 %v1186
    %v1339 = vunpack.c.l.b16 %v1187
    %v1340 = vunpack.c.h.b16 %v1187
    %v1341 = vunpack.c.l.b16 %v1188
    %v1342 = vunpack.c.h.b16 %v1188
    %v1343 = vunpack.c.l.b16 %v1189
    %v1344 = vunpack.c.h.b16 %v1189
    %v1345 = vunpack.c.l.b16 %v1190
    %v1346 = vunpack.c.h.b16 %v1190
    %v1347 = vunpack.c.l.b16 %v1191
    %v1348 = vunpack.c.h.b16 %v1191
    %v1349 = vunpack.c.l.b16 %v1192
    %v1350 = vunpack.c.h.b16 %v1192
    %v1351 = vunpack.c.l.b16 %v1193
    %v1352 = vunpack.c.h.b16 %v1193
    %v1353 = vunpack.c.l.b16 %v1194
    %v1354 = vunpack.c.h.b16 %v1194
    %v1355 = vunpack.c.l.b16 %v1195
    %v1356 = vunpack.c.h.b16 %v1195
    %v1357 = vunpack.c.l.b16 %v1196
    %v1358 = vunpack.c.h.b16 %v1196
    %v1359 = vunpack.c.l.b16 %v1197
    %v1360 = vunpack.c.h.b16 %v1197
    %v1361 = vunpack.c.l.b16 %v1198
    %v1362 = vunpack.c.h.b16 %v1198
    %v1363 = vunpack.c.l.b16 %v1199
    %v1364 = vunpack.c.h.b16 %v1199
    %v1365 = vunpack.c.l.b16 %v1200
    %v1366 = vunpack.c.h.b16 %v1200
    %v1367 = vunpack.c.l.b16 %v1201
    %v1368 = vunpack.c.h.b16 %v1201
    %v1369 = vunpack.c.l.b16 %v1202
    %v1370 = vunpack.c.h.b16 %v1202
    %v1371 = vunpack.c.l.b16 %v1203
    %v1372 = vunpack.c.h.b16 %v1203
    %v1373 = vunpack.c.l.b16 %v1204
    %v1374 = vunpack.c.h.b16 %v1204
    %v1375 = vunpack.c.l.b16 %v1205
    %v1376 = vunpack.c.h.b16 %v1205
    %v1377 = vunpack.c.l.b16 %v1206
    %v1378 = vunpack.c.h.b16 %v1206
    %v1379 = vunpack.c.l.b16 %v1207
    %v1380 = vunpack.c.h.b16 %v1207
    %v1381 = vunpack.c.l.b16 %v1208
    %v1382 = vunpack.c.h.b16 %v1208
    %v1383 = vunpack.c.l.b16 %v1209
    %v1384 = vunpack.c.h.b16 %v1209
    %v1385 = vunpack.c.l.b16 %v1210
    %v1386 = vunpack.c.h.b16 %v1210
    %v1387 = vunpack.c.l.b16 %v1211
    %v1388 = vunpack.c.h.b16 %v1211
    %v1389 = vunpack.c.l.b16 %v1212
    %v1390 = vunpack.c.h.b16 %v1212
    %v1391 = vunpack.c.l.b16 %v1213
    %v1392 = vunpack.c.h.b16 %v1213
    %v1393 = vunpack.c.l.b16 %v1214
    %v1394 = vunpack.c.h.b16 %v1214
    %v1395 = vunpack.c.l.b16 %v1215
    %v1396 = vunpack.c.h.b16 %v1215
    %v1397 = vunpack.c.l.b16 %v1216
    %v1398 = vunpack.c.h.b16 %v1216
    %v1399 = vunpack.c.l.b16 %v1217
    %v1400 = vunpack.c.h.b16 %v1217
    %v1401 = vunpack.c.l.b16 %v1218
    %v1402 = vunpack.c.h.b16 %v1218
    %v1403 = vunpack.c.l.b16 %v1219
    %v1404 = vunpack.c.h.b16 %v1219
    %v1405 = vunpack.c.l.b16 %v1220
    %v1406 = vunpack.c.h.b16 %v1220
    %v1407 = vunpack.c.l.b16 %v1221
    %v1408 = vunpack.c.h.b16 %v1221
    %v1409 = vunpack.c.l.b16 %v1222
    %v1410 = vunpack.c.h.b16 %v1222
    %v1411 = vunpack.c.l.b16 %v1223
    %v1412 = vunpack.c.h.b16 %v1223
    %v1413 = vunpack.c.l.b16 %v1224
    %v1414 = vunpack.c.h.b16 %v1224
    %v1415 = vunpack.c.l.b16 %v1225
    %v1416 = vunpack.c.h.b16 %v1225
    %v1417 = vunpack.c.l.b16 %v1226
    %v1418 = vunpack.c.h.b16 %v1226
    %v1419 = vunpack.c.l.b16 %v1227
    %v1420 = vunpack.c.h.b16 %v1227
    %v1421 = vunpack.c.l.b16 %v1228
    %v1422 = vunpack.c.h.b16 %v1228
    %v1423 = vunpack.c.l.b16 %v1229
    %v1424 = vunpack.c.h.b16 %v1229
    %v1425 = vunpack.c.l.b16 %v1230
    %v1426 = vunpack.c.h.b16 %v1230
    %v1427 = vunpack.c.l.b16 %v1231
    %v1428 = vunpack.c.h.b16 %v1231
    %v1429 = vunpack.c.l.b16 %v1232
    %v1430 = vunpack.c.h.b16 %v1232
    %v1431 = vunpack.c.l.b16 %v1233
    %v1432 = vunpack.c.h.b16 %v1233
    %v1433 = vunpack.c.l.b16 %v1234
    %v1434 = vunpack.c.h.b16 %v1234
    %v1435 = vunpack.c.l.b16 %v1235
    %v1436 = vunpack.c.h.b16 %v1235
    %v1437 = vunpack.c.l.b16 %v1236
    %v1438 = vunpack.c.h.b16 %v1236
    %v1439 = vunpack.c.l.b16 %v1237
    %v1440 = vunpack.c.h.b16 %v1237
    %v1441 = vunpack.c.l.b16 %v1238
    %v1442 = vunpack.c.h.b16 %v1238
    %v1443 = vpack.c.b16 %v1317, %v1315
    %v1444 = vpack.c.b16 %v1318, %v1316
    %v1445 = vpack.c.b16 %v1321, %v1319
    %v1446 = vpack.c.b16 %v1322, %v1320
    %v1447 = vpack.c.b16 %v1325, %v1323
    %v1448 = vpack.c.b16 %v1326, %v1324
    %v1449 = vpack.c.b16 %v1329, %v1327
    %v1450 = vpack.c.b16 %v1330, %v1328
    %v1451 = vpack.c.b16 %v1333, %v1331
    %v1452 = vpack.c.b16 %v1334, %v1332
    %v1453 = vpack.c.b16 %v1337, %v1335
    %v1454 = vpack.c.b16 %v1338, %v1336
    %v1455 = vpack.c.b16 %v1341, %v1339
    %v1456 = vpack.c.b16 %v1342, %v1340
    %v1457 = vpack.c.b16 %v1345, %v1343
    %v1458 = vpack.c.b16 %v1346, %v1344
    %v1459 = vpack.c.b16 %v1349, %v1347
    %v1460 = vpack.c.b16 %v1350, %v1348
    %v1461 = vpack.c.b16 %v1353, %v1351
    %v1462 = vpack.c.b16 %v1354, %v1352
    %v1463 = vpack.c.b16 %v1357, %v1355
    %v1464 = vpack.c.b16 %v1358, %v1356
    %v1465 = vpack.c.b16 %v1361, %v1359
    %v1466 = vpack.c.b16 %v1362, %v1360
    %v1467 = vpack.c.b16 %v1365, %v1363
    %v1468 = vpack.c.b16 %v1366, %v1364
    %v1469 = vpack.c.b16 %v1369, %v1367
    %v1470 = vpack.c.b16 %v1370, %v1368
    %v1471 = vpack.c.b16 %v1373, %v1371
    %v1472 = vpack.c.b16 %v1374, %v1372
    %v1473 = vpack.c.b16 %v1377, %v1375
    %v1474 = vpack.c.b16 %v1378, %v1376
    %v1475 = vpack.c.b16 %v1381, %v1379
    %v1476 = vpack.c.b16 %v1382, %v1380
    %v1477 = vpack.c.b16 %v1385, %v1383
    %v1478 = vpack.c.b16 %v1386, %v1384
    %v1479 = vpack.c.b16 %v1389, %v1387
    %v1480 = vpack.c.b16 %v1390, %v1388
    %v1481 = vpack.c.b16 %v1393, %v1391
    %v1482 = vpack.c.b16 %v1394, %v1392
    %v1483 = vpack.c.b16 %v1397, %v1395
    %v1484 = vpack.c.b16 %v1398, %v1396
    %v1485 = vpack.c.b16 %v1401, %v1399
    %v1486 = vpack.c.b16 %v1402, %v1400
    %v1487 = vpack.c.b16 %v1405, %v1403
    %v1488 = vpack.c.b16 %v1406, %v1404
    %v1489 = vpack.c.b16 %v1409, %v1407
    %v1490 = vpack.c.b16 %v1410, %v1408
    %v1491 = vpack.c.b16 %v1413, %v1411
    %v1492 = vpack.c.b16 %v1414, %v1412
    %v1493 = vpack.c.b16 %v1417, %v1415
    %v1494 = vpack.c.b16 %v1418, %v1416
    %v1495 = vpack.c.b16 %v1421, %v1419
    %v1496 = vpack.c.b16 %v1422, %v1420
    %v1497 = vpack.c.b16 %v1425, %v1423
    %v1498 = vpack.c.b16 %v1426, %v1424
    %v1499 = vpack.c.b16 %v1429, %v1427
    %v1500 = vpack.c.b16 %v1430, %v1428
    %v1501 = vpack.c.b16 %v1433, %v1431
    %v1502 = vpack.c.b16 %v1434, %v1432
    %v1503 = vpack.c.b16 %v1437, %v1435
    %v1504 = vpack.c.b16 %v1438, %v1436
    %v1505 = vpack.c.b16 %v1441, %v1439
    %v1506 = vpack.c.b16 %v1442, %v1440
    %1571 = vmatprep.subr.bf16.mxu0 %v1458
    %1572 = vmatpush1.bf16.msra.mxu0 %v1457
    %1573 = vmatprep.subr.bf16.mxu0 %v1456
    %1574 = vmatpush1.bf16.msra.mxu0 %v1455
    %1575 = vmatprep.subr.bf16.mxu0 %v1454
    %1576 = vmatpush1.bf16.msra.mxu0 %v1453
    %1577 = vmatprep.subr.bf16.mxu0 %v1452
    %1578 = vmatpush1.bf16.msra.mxu0 %v1451
    %1579 = vmatprep.subr.bf16.mxu0 %v1450
    %1580 = vmatpush1.bf16.msra.mxu0 %v1449
    %1581 = vmatprep.subr.bf16.mxu0 %v1448
    %1582 = vmatpush1.bf16.msra.mxu0 %v1447
    %1583 = vmatprep.subr.bf16.mxu0 %v1446
    %1584 = vmatpush1.bf16.msra.mxu0 %v1445
    %1585 = vmatprep.subr.bf16.mxu0 %v1444
    %1586 = vmatpush1.bf16.msra.mxu0 %v1443
    %1587 = vmatprep.subr.bf16.mxu0 %v1474
    %1588 = vmatpush2.bf16.msra.mxu0 %v1473
    %1589 = vmatprep.subr.bf16.mxu0 %v1472
    %1590 = vmatpush2.bf16.msra.mxu0 %v1471
    %1591 = vmatprep.subr.bf16.mxu0 %v1470
    %1592 = vmatpush2.bf16.msra.mxu0 %v1469
    %1593 = vmatprep.subr.bf16.mxu0 %v1468
    %1594 = vmatpush2.bf16.msra.mxu0 %v1467
    %1595 = vmatprep.subr.bf16.mxu0 %v1466
    %1596 = vmatpush2.bf16.msra.mxu0 %v1465
    %1597 = vmatprep.subr.bf16.mxu0 %v1464
    %1598 = vmatpush2.bf16.msra.mxu0 %v1463
    %1599 = vmatprep.subr.bf16.mxu0 %v1462
    %1600 = vmatpush2.bf16.msra.mxu0 %v1461
    %1601 = vmatprep.subr.bf16.mxu0 %v1460
    %1602 = vmatpush2.bf16.msra.mxu0 %v1459
    %1603 = vmatprep.mubr.bf16.mxu0 %v1172
    %1604 = vmatmul.mubr.bf16.gmra.mxu0 %v1171
    %v1605 = vpop.f32.mrf.mxu0
    %v1606 = vadd.f32 %v1244, %v1605
    %v1607 = vpop.f32.mrf.mxu0
    %v1608 = vadd.f32 %v1248, %v1607
    %v1609 = vpop.f32.mrf.mxu0
    %v1610 = vpop.f32.mrf.mxu0
    %1611 = vdwg.mxu0
    %1612 = vmatprep.subr.bf16.mxu0 %v1490
    %1613 = vmatpush1.bf16.msra.mxu0 %v1489
    %1614 = vmatprep.subr.bf16.mxu0 %v1488
    %1615 = vmatpush1.bf16.msra.mxu0 %v1487
    %1616 = vmatprep.subr.bf16.mxu0 %v1486
    %1617 = vmatpush1.bf16.msra.mxu0 %v1485
    %1618 = vmatprep.subr.bf16.mxu0 %v1484
    %1619 = vmatpush1.bf16.msra.mxu0 %v1483
    %1620 = vmatprep.subr.bf16.mxu0 %v1482
    %1621 = vmatpush1.bf16.msra.mxu0 %v1481
    %1622 = vmatprep.subr.bf16.mxu0 %v1480
    %1623 = vmatpush1.bf16.msra.mxu0 %v1479
    %1624 = vmatprep.subr.bf16.mxu0 %v1478
    %1625 = vmatpush1.bf16.msra.mxu0 %v1477
    %1626 = vmatprep.subr.bf16.mxu0 %v1476
    %1627 = vmatpush1.bf16.msra.mxu0 %v1475
    %1628 = vmatprep.subr.bf16.mxu0 %v1506
    %1629 = vmatpush2.bf16.msra.mxu0 %v1505
    %1630 = vmatprep.subr.bf16.mxu0 %v1504
    %1631 = vmatpush2.bf16.msra.mxu0 %v1503
    %1632 = vmatprep.subr.bf16.mxu0 %v1502
    %1633 = vmatpush2.bf16.msra.mxu0 %v1501
    %1634 = vmatprep.subr.bf16.mxu0 %v1500
    %1635 = vmatpush2.bf16.msra.mxu0 %v1499
    %1636 = vmatprep.subr.bf16.mxu0 %v1498
    %1637 = vmatpush2.bf16.msra.mxu0 %v1497
    %1638 = vmatprep.subr.bf16.mxu0 %v1496
    %1639 = vmatpush2.bf16.msra.mxu0 %v1495
    %1640 = vmatprep.subr.bf16.mxu0 %v1494
    %1641 = vmatpush2.bf16.msra.mxu0 %v1493
    %1642 = vmatprep.subr.bf16.mxu0 %v1492
    %1643 = vmatpush2.bf16.msra.mxu0 %v1491
    %1644 = vmatprep.mubr.bf16.mxu0 %v1174
    %1645 = vmatmul.mubr.bf16.gmra.mxu0 %v1173
    %v1646 = vpop.f32.mrf.mxu0
    %v1647 = vadd.f32 %v1606, %v1646
    %v1648 = vpop.f32.mrf.mxu0
    %v1649 = vadd.f32 %v1608, %v1648
    %v1650 = vpop.f32.mrf.mxu0
    %v1651 = vpop.f32.mrf.mxu0
    %1652 = vdwg.mxu0
    %v1653 = vmax.f32 %v1647, 0.0
    %v1654 = vmax.f32 %v1649, 0.0
    %v1655 = vpack.c.bf16 %v1653, %v1653
    %v1656 = vpack.c.bf16 %v1654, %v1654
    %v1657 = vld [vmem:[#allocation12] sm:$0xf]
    %v1658 = vld [vmem:[#allocation12 + $0x4] sm:$0xf]
    %v1659 = vld [vmem:[#allocation12 + $0x8] sm:$0xf]
    %v1660 = vld [vmem:[#allocation12 + $0xc] sm:$0xf]
    %v1661 = vld [vmem:[#allocation12 + $0x10] sm:$0xf]
    %v1662 = vld [vmem:[#allocation12 + $0x14] sm:$0xf]
    %v1663 = vld [vmem:[#allocation12 + $0x18] sm:$0xf]
    %v1664 = vld [vmem:[#allocation12 + $0x1c] sm:$0xf]
    %v1665 = vld [vmem:[#allocation12 + $0x20] sm:$0xf]
    %v1666 = vld [vmem:[#allocation12 + $0x24] sm:$0xf]
    %v1667 = vld [vmem:[#allocation12 + $0x28] sm:$0xf]
    %v1668 = vld [vmem:[#allocation12 + $0x2c] sm:$0xf]
    %v1669 = vld [vmem:[#allocation12 + $0x30] sm:$0xf]
    %v1670 = vld [vmem:[#allocation12 + $0x34] sm:$0xf]
    %v1671 = vld [vmem:[#allocation12 + $0x38] sm:$0xf]
    %v1672 = vld [vmem:[#allocation12 + $0x3c] sm:$0xf]
    %v1673 = vld [vmem:[#allocation12 + $0x40] sm:$0xf]
    %v1674 = vld [vmem:[#allocation12 + $0x44] sm:$0xf]
    %v1675 = vld [vmem:[#allocation12 + $0x48] sm:$0xf]
    %v1676 = vld [vmem:[#allocation12 + $0x4c] sm:$0xf]
    %v1677 = vld [vmem:[#allocation12 + $0x50] sm:$0xf]
    %v1678 = vld [vmem:[#allocation12 + $0x54] sm:$0xf]
    %v1679 = vld [vmem:[#allocation12 + $0x58] sm:$0xf]
    %v1680 = vld [vmem:[#allocation12 + $0x5c] sm:$0xf]
    %v1681 = vld [vmem:[#allocation12 + $0x60] sm:$0xf]
    %v1682 = vld [vmem:[#allocation12 + $0x64] sm:$0xf]
    %v1683 = vld [vmem:[#allocation12 + $0x68] sm:$0xf]
    %v1684 = vld [vmem:[#allocation12 + $0x6c] sm:$0xf]
    %v1685 = vld [vmem:[#allocation12 + $0x70] sm:$0xf]
    %v1686 = vld [vmem:[#allocation12 + $0x74] sm:$0xf]
    %v1687 = vld [vmem:[#allocation12 + $0x78] sm:$0xf]
    %v1688 = vld [vmem:[#allocation12 + $0x7c] sm:$0xf]
    %v1689 = vld [vmem:[%s8] sm:$0x1]
    %v1691 = vlaneseq
    %v1692 = vshrl.u32 %v1691, 7
    %v1693 = vsub.s32 0, %v1692
    %v1694 = vrot.slane %v1689, %v1693
    %v1728 = vunpack.c.l.b16 %v1657
    %v1729 = vunpack.c.l.b16 %v1658
    %v1730 = vunpack.c.l.b16 %v1659
    %v1731 = vunpack.c.l.b16 %v1660
    %v1732 = vunpack.c.l.b16 %v1661
    %v1733 = vunpack.c.l.b16 %v1662
    %v1734 = vunpack.c.l.b16 %v1663
    %v1735 = vunpack.c.l.b16 %v1664
    %v1736 = vunpack.c.l.b16 %v1665
    %v1737 = vunpack.c.l.b16 %v1666
    %v1738 = vunpack.c.l.b16 %v1667
    %v1739 = vunpack.c.l.b16 %v1668
    %v1740 = vunpack.c.l.b16 %v1669
    %v1741 = vunpack.c.l.b16 %v1670
    %v1742 = vunpack.c.l.b16 %v1671
    %v1743 = vunpack.c.l.b16 %v1672
    %v1744 = vunpack.c.l.b16 %v1673
    %v1745 = vunpack.c.l.b16 %v1674
    %v1746 = vunpack.c.l.b16 %v1675
    %v1747 = vunpack.c.l.b16 %v1676
    %v1748 = vunpack.c.l.b16 %v1677
    %v1749 = vunpack.c.l.b16 %v1678
    %v1750 = vunpack.c.l.b16 %v1679
    %v1751 = vunpack.c.l.b16 %v1680
    %v1752 = vunpack.c.l.b16 %v1681
    %v1753 = vunpack.c.l.b16 %v1682
    %v1754 = vunpack.c.l.b16 %v1683
    %v1755 = vunpack.c.l.b16 %v1684
    %v1756 = vunpack.c.l.b16 %v1685
    %v1757 = vunpack.c.l.b16 %v1686
    %v1758 = vunpack.c.l.b16 %v1687
    %v1759 = vunpack.c.l.b16 %v1688
    %v1760 = vpack.c.b16 %v1729, %v1728
    %v1761 = vpack.c.b16 %v1731, %v1730
    %v1762 = vpack.c.b16 %v1733, %v1732
    %v1763 = vpack.c.b16 %v1735, %v1734
    %v1764 = vpack.c.b16 %v1737, %v1736
    %v1765 = vpack.c.b16 %v1739, %v1738
    %v1766 = vpack.c.b16 %v1741, %v1740
    %v1767 = vpack.c.b16 %v1743, %v1742
    %v1768 = vpack.c.b16 %v1745, %v1744
    %v1769 = vpack.c.b16 %v1747, %v1746
    %v1770 = vpack.c.b16 %v1749, %v1748
    %v1771 = vpack.c.b16 %v1751, %v1750
    %v1772 = vpack.c.b16 %v1753, %v1752
    %v1773 = vpack.c.b16 %v1755, %v1754
    %v1774 = vpack.c.b16 %v1757, %v1756
    %v1775 = vpack.c.b16 %v1759, %v1758
    %1792 = vmatprep.subr.bf16.mxu0 0
    %1793 = vmatpush1.bf16.msra.mxu0 %v1767
    %1794 = vmatprep.subr.bf16.mxu0 0
    %1795 = vmatpush1.bf16.msra.mxu0 %v1766
    %1796 = vmatprep.subr.bf16.mxu0 0
    %1797 = vmatpush1.bf16.msra.mxu0 %v1765
    %1798 = vmatprep.subr.bf16.mxu0 0
    %1799 = vmatpush1.bf16.msra.mxu0 %v1764
    %1800 = vmatprep.subr.bf16.mxu0 0
    %1801 = vmatpush1.bf16.msra.mxu0 %v1763
    %1802 = vmatprep.subr.bf16.mxu0 0
    %1803 = vmatpush1.bf16.msra.mxu0 %v1762
    %1804 = vmatprep.subr.bf16.mxu0 0
    %1805 = vmatpush1.bf16.msra.mxu0 %v1761
    %1806 = vmatprep.subr.bf16.mxu0 0
    %1807 = vmatpush1.bf16.msra.mxu0 %v1760
    %1808 = vmatprep.subr.bf16.mxu0 0
    %1809 = vmatpush2.bf16.msra.mxu0 %v1775
    %1810 = vmatprep.subr.bf16.mxu0 0
    %1811 = vmatpush2.bf16.msra.mxu0 %v1774
    %1812 = vmatprep.subr.bf16.mxu0 0
    %1813 = vmatpush2.bf16.msra.mxu0 %v1773
    %1814 = vmatprep.subr.bf16.mxu0 0
    %1815 = vmatpush2.bf16.msra.mxu0 %v1772
    %1816 = vmatprep.subr.bf16.mxu0 0
    %1817 = vmatpush2.bf16.msra.mxu0 %v1771
    %1818 = vmatprep.subr.bf16.mxu0 0
    %1819 = vmatpush2.bf16.msra.mxu0 %v1770
    %1820 = vmatprep.subr.bf16.mxu0 0
    %1821 = vmatpush2.bf16.msra.mxu0 %v1769
    %1822 = vmatprep.subr.bf16.mxu0 0
    %1823 = vmatpush2.bf16.msra.mxu0 %v1768
    %1824 = vmatprep.mubr.bf16.mxu0 %v1656
    %1825 = vmatmul.mubr.bf16.gmra.mxu0 %v1655
    %v1826 = vpop.f32.mrf.mxu0
    %v1827 = vadd.f32 %v1694, %v1826
    %v1828 = vpop.f32.mrf.mxu0
    %v1829 = vpop.f32.mrf.mxu0
    %v1830 = vpop.f32.mrf.mxu0
    %1831 = vdwg.mxu0
    %v1832 = vlaneseq
    %v1833 = vand.u32 %v1832, 127
    %vm1834 = vcmp.lt.s32.totalorder %v1833, 10
    %v1835 = vsel %vm1834, %v1827, -1e+30
    %v1836 = vsel %vm1085, %v1835, -inf
    %1837 = vmax.xlane.f32.xlu0 %v1836
    %v1838 = vpop.xlane.xlu0 %1837
    %v1839 = vsub.f32 %v1835, %v1838
    %v1840 = vmul.f32 %v1839, 1.442695
    %v1841 = vpow.pop %v1840
    %v1842 = vsel %vm1085, %v1841, 0.0
    %1843 = vadd.xlane.f32.xlu0 %v1842
    %v1844 = vpop.xlane.xlu0 %1843
    %v1845 = vrcp.pop %v1844
    %v1846 = vmul.f32 %v1841, %v1845
    %1847 = vst [vmem:[#allocation14] sm:$0x3] %v1846
    // Predicated region
    $region62: #{emoji_net_forward.1} parent=1 // pred_check
      _
    $region63: #{emoji_net_forward.1} parent=1 // pred_check_branch
      %1849 = sbr.rel (0) target = $region65
    $region64: #{emoji_net_forward.1} parent=1 // pred_region
      %s1851 = ssub.s32 32, 32
      %1852 = vsyncadd [#allocation5], %s1851
      %s1854 = sshll.u32 [#allocation14], 4
      %s1855 = int_to_ptr.vmem [resolvable:$true] %s1854
      %1857 = dma.vmem_to_hbm [thread:$0]  %s1855, 32, %s9, [#allocation5]
    $region65: #{emoji_net_forward.1} parent=1 // pred_fallthru
      _
    // Predicated region
    $region66: #{emoji_net_forward.1} parent=1 // pred_check
      _
    $region67: #{emoji_net_forward.1} parent=1 // pred_check_branch
      %1859 = sbr.rel (0) target = $region69
    $region68: #{emoji_net_forward.1} parent=1 // pred_region
      %1860 = dma.done [#allocation5], 32
    $region69: #{emoji_net_forward.1} parent=1 // pred_fallthru
      _
    %1861 = vsyncpa [#allocation4], 1
    %1862 = vsyncpa [#allocation7], 1
    %1863 = vsyncpa [#allocation10], 1
    %1864 = vsyncpa [#allocation13], 1
    %1865 = vsyncpa [#allocation5], 1

</llo_original>
